<compile_context>
chip_gen: v6e
topology: v6e:2x2x1
jax: 0.10.0
libtpu: 0.0.40
codegen_flags: <defaults>
</compile_context>

<pallas_src>
import jax
import jax.numpy as jnp
import numpy as np
from jax.experimental import pallas as pl
from jax.experimental.pallas import tpu as pltpu

# ----------------------------- model config ---------------------------------
NTYPES = ("process", "file")
NUM_NODES = {"process": 12, "file": 10}
# canonical relations (src_type, relation_name, dst_type)
RELATIONS = (
    ("process", "forks", "process"),
    ("process", "writes", "file"),
    ("file", "read_by", "process"),
)
NUM_LAYERS = 2
IN_DIM = 16       # input_feature_size
HIDDEN = 32       # hidden_dimension_size

NP_ = NUM_NODES["process"]
NF_ = NUM_NODES["file"]
N_ALL = NP_ + NF_                    # 22 (process rows first, then file rows)
ATT_END = 3 * HIDDEN + 6             # 102: [w_pp|w_pf|w_fp| wal/war x3]


# --------------------------- shared math (kernel == reference) ---------------
def _elu(s):
    # ELU, clamp the discarded branch so no inf is ever produced
    return jnp.where(s > 0.0, s, jnp.exp(jnp.minimum(s, 0.0)) - 1.0)


def _gat_edge_softmax(z_src, el_row, er_col, adj, b):
    """Single-head GAT message for one relation.

    z_src: (Ns, H) projected source feats, el_row: (1, Ns), er_col: (Nd, 1),
    adj: (Nd, Ns) in {0,1}, b: (1, H) -> (Nd, H)
    """
    e = er_col + el_row                               # (Nd, Ns)
    e = jnp.maximum(e, 0.2 * e)                       # LeakyReLU(0.2), DGL default
    e = e + (adj - 1.0) * 1e30                        # additive edge mask (f32 only!)
    e_max = jnp.max(e, axis=1, keepdims=True)
    p = jnp.exp(e - e_max) * adj                      # re-mask: zero-in-degree rows -> 0
    denom = jnp.maximum(jnp.sum(p, axis=1, keepdims=True), 1e-30)
    alpha = p / denom
    return jnp.dot(alpha, z_src, preferred_element_type=jnp.float32) + b


def _hetero_gat_layer(h_all, adj, W, b_all):
    """One HeteroGraphConv({rel: GATConv}) layer, aggregate='sum'.

    h_all: (N_ALL, d_in)   process rows then file rows.
    adj:   (N_ALL, N_ALL)  dense blocks (dst, src):
           [:NP,:NP]=forks  [NP:,:NP]=writes  [:NP,NP:]=read_by  [NP:,NP:]=0.
    W:     (d_in, ATT_END) = [w_pp|w_pf|w_fp| wal_pp war_pp wal_pf war_pf wal_fp war_fp]
    b_all: (1, 3H)         = [b_pp|b_pf|b_fp]
    Returns (new_process (NP,H), new_file (NF,H)) without activation.
    """
    H = HIDDEN
    # one lane-dense matmul: all relation projections + all attention scalars
    za = jnp.dot(h_all, W, preferred_element_type=jnp.float32)      # (N_ALL, 3H+6)
    att = za[:, 3 * H:]                                             # (N_ALL, 6)
    att_t = att.T                                                   # one transpose / layer
    # relation forks: process -> process
    o_pp = _gat_edge_softmax(za[:NP_, 0:H], att_t[0:1, :NP_], att[:NP_, 1:2],
                             adj[:NP_, :NP_], b_all[:, 0:H])
    # relation writes: process -> file
    o_pf = _gat_edge_softmax(za[:NP_, H:2 * H], att_t[2:3, :NP_], att[NP_:, 3:4],
                             adj[NP_:, :NP_], b_all[:, H:2 * H])
    # relation read_by: file -> process
    o_fp = _gat_edge_softmax(za[NP_:, 2 * H:3 * H], att_t[4:5, NP_:], att[:NP_, 5:6],
                             adj[:NP_, NP_:], b_all[:, 2 * H:3 * H])
    # HeteroGraphConv aggregate='sum' over relations per destination type
    return o_pp + o_fp, o_pf


def _forward_single(x_all, adj, p0, p1):
    """Whole BinaryHeteroClassifier forward for one graph -> (1, 1) prob."""
    hp, hf = _hetero_gat_layer(x_all, adj, p0[:IN_DIM, :], p0[IN_DIM:, :3 * HIDDEN])
    h_all = jnp.concatenate([_elu(hp), _elu(hf)], axis=0)           # ELU between layers
    hp, hf = _hetero_gat_layer(h_all, adj, p1[:HIDDEN, :ATT_END],
                               p1[HIDDEN:, :3 * HIDDEN])
    # hg = sum over node types of mean_nodes(x, ntype)   (both ntypes non-empty)
    hg = (jnp.sum(hp, axis=0, keepdims=True) * (1.0 / NP_)
          + jnp.sum(hf, axis=0, keepdims=True) * (1.0 / NF_))       # (1, H)
    w_cls = p1[:HIDDEN, ATT_END:ATT_END + 1]                        # (H, 1)
    b_cls = p1[HIDDEN:HIDDEN + 1, ATT_END:ATT_END + 1]              # (1, 1)
    logit = jnp.dot(hg, w_cls, preferred_element_type=jnp.float32) + b_cls
    return jax.nn.sigmoid(logit)                                    # (1, 1)


# ------------------------------ Pallas kernel --------------------------------
def fused_forward_kernel(x_ref, adj_ref, p0_ref, p1_ref, out_ref):
    # x_ref: (N_ALL, IN_DIM), adj_ref: (N_ALL, N_ALL),
    # p0_ref: (IN_DIM+1, 102), p1_ref: (HIDDEN+1, 103), out_ref: (1, 1)
    out_ref[...] = _forward_single(x_ref[...], adj_ref[...], p0_ref[...], p1_ref[...])


def forward(x_batch, adj_batch, p0, p1):
    B = x_batch.shape[0]
    # rough per-graph costs for the XLA scheduler
    mm = 2 * (N_ALL * IN_DIM * ATT_END + N_ALL * HIDDEN * ATT_END
              + 2 * (NP_ * NP_ + NF_ * NP_ + NP_ * NF_) * HIDDEN + HIDDEN)
    tr = 2 * (NP_ * NP_ + NF_ * NP_ + NP_ * NF_) + N_ALL * HIDDEN + 1
    bytes_graph = 4 * (N_ALL * IN_DIM + N_ALL * N_ALL + 1)
    cost = pl.CostEstimate(
        flops=B * mm,
        transcendentals=B * tr,
        bytes_accessed=B * bytes_graph + 4 * (p0.size + p1.size))

    return pl.pallas_call(
        fused_forward_kernel,
        out_shape=jax.ShapeDtypeStruct((B, 1, 1), jnp.float32),
        grid=(B,),
        in_specs=[
            pl.BlockSpec((None, N_ALL, IN_DIM), lambda g: (g, 0, 0)),
            pl.BlockSpec((None, N_ALL, N_ALL), lambda g: (g, 0, 0)),
            # weights: constant block index -> DMA'd once, VMEM-resident
            pl.BlockSpec((IN_DIM + 1, ATT_END), lambda g: (0, 0)),
            pl.BlockSpec((HIDDEN + 1, ATT_END + 1), lambda g: (0, 0)),
        ],
        out_specs=pl.BlockSpec((None, 1, 1), lambda g: (g, 0, 0)),
        compiler_params=pltpu.CompilerParams(
            dimension_semantics=("parallel",)),     # v7x: graphs across both TCs
        cost_estimate=cost,
    )(x_batch, adj_batch, p0, p1)


# ------------------------------ params ---------------------------------------
def init_params(key):
    """Pack per-layer GAT params (with folded attention vectors) into blobs.

    blob0: (IN_DIM+1, 102)    rows 0..Din = [w_pp|w_pf|w_fp|wal/war x3], row Din = biases
    blob1: (HIDDEN+1, 103)    same layout + extra column = [w_cls ; b_cls]
    """
    blobs = []
    for layer in range(NUM_LAYERS):
        d_in = IN_DIM if layer == 0 else HIDDEN
        w_cols, att_cols, b_cols = [], [], []
        for _ in RELATIONS:
            key, kw, kal, kar, kb = jax.random.split(key, 5)
            w = jax.random.normal(kw, (d_in, HIDDEN), jnp.float32) / jnp.sqrt(d_in)
            a_l = jax.random.normal(kal, (HIDDEN, 1), jnp.float32) / jnp.sqrt(HIDDEN)
            a_r = jax.random.normal(kar, (HIDDEN, 1), jnp.float32) / jnp.sqrt(HIDDEN)
            b = 0.1 * jax.random.normal(kb, (1, HIDDEN), jnp.float32)
            w_cols.append(w)
            att_cols.append(w @ a_l)      # fold: (x@w)@a_l == x@(w@a_l)
            att_cols.append(w @ a_r)
            b_cols.append(b)
        top = jnp.concatenate(w_cols + att_cols, axis=1)                 # (d_in, 102)
        bot = jnp.concatenate(b_cols + [jnp.zeros((1, 6), jnp.float32)], axis=1)
        blobs.append(jnp.concatenate([top, bot], axis=0))                # (d_in+1, 102)
    # fold the classifier (Linear(H, 1)) into the layer-1 blob as one extra column
    key, kc, kcb = jax.random.split(key, 3)
    w_cls = jax.random.normal(kc, (HIDDEN, 1), jnp.float32) / jnp.sqrt(HIDDEN)
    b_cls = 0.1 * jax.random.normal(kcb, (1, 1), jnp.float32)
    cls_col = jnp.concatenate([w_cls, b_cls], axis=0)                    # (H+1, 1)
    blobs[1] = jnp.concatenate([blobs[1], cls_col], axis=1)              # (H+1, 103)
    return blobs[0], blobs[1]


# --------------------------------- main ---------------------------------------
if __name__ == "__main__":
    B = 8                                          # batch of graphs per pallas_call
    key = jax.random.PRNGKey(0)
    key, kf, ka = jax.random.split(key, 3)

    # node features: process rows then file rows, packed per graph
    x_batch = jax.random.normal(kf, (B, N_ALL, IN_DIM), jnp.float32)

    # dense block adjacency per graph; file->file block is zero (no such relation)
    adj_batch = (jax.random.uniform(ka, (B, N_ALL, N_ALL)) < 0.3).astype(jnp.float32)
    adj_batch = adj_batch.at[:, NP_:, NP_:].set(0.0)

    p0, p1 = init_params(key)

    out = jax.jit(forward)(x_batch, adj_batch, p0, p1)
    out = jax.block_until_ready(out)

    # pure-JAX reference (same shared math, vmapped over the batch)
    ref = jax.vmap(_forward_single, in_axes=(0, 0, None, None))(
        x_batch, adj_batch, p0, p1)

    assert out.shape == (B, 1, 1) and out.dtype == jnp.float32
    assert bool(jnp.all(jnp.isfinite(out)))
    np.testing.assert_allclose(np.asarray(out).reshape(B),
                               np.asarray(ref).reshape(B),
                               atol=2e-3, rtol=2e-3)
    print("KERNEL_OK")
</pallas_src>

<mosaic_0001>
module attributes {stable_mosaic.version = 11 : i64} {
  func.func @fused_forward_kernel(%arg0: i32, %arg1: memref<1x22x16xf32, #tpu.memory_space<vmem>>, %arg2: memref<1x22x22xf32, #tpu.memory_space<vmem>>, %arg3: memref<17x102xf32, #tpu.memory_space<vmem>>, %arg4: memref<33x103xf32, #tpu.memory_space<vmem>>, %arg5: memref<1x1x1xf32, #tpu.memory_space<vmem>>) attributes {dimension_semantics = [#tpu.dimension_semantics<parallel>], iteration_bounds = array<i64: 8>, scalar_prefetch = 0 : i64, scratch_operands = 0 : i64, tpu.core_type = #tpu.core_type<tc>, window_params = [{transform_indices = @transform_0, window_bounds = array<i64: 1, 22, 16>}, {transform_indices = @transform_1, window_bounds = array<i64: 1, 22, 22>}, {pipeline_mode = #tpu.pipeline_mode<synchronous>, transform_indices = @transform_2, window_bounds = array<i64: 17, 102>}, {pipeline_mode = #tpu.pipeline_mode<synchronous>, transform_indices = @transform_3, window_bounds = array<i64: 33, 103>}, {transform_indices = @transform_4, window_bounds = array<i64: 1, 1, 1>}]} {
    %c0 = arith.constant 0 : index
    %c0_0 = arith.constant 0 : index
    %c0_1 = arith.constant 0 : index
    %0 = vector.load %arg1[%c0, %c0_0, %c0_1] : memref<1x22x16xf32, #tpu.memory_space<vmem>>, vector<1x22x16xf32>
    %1 = vector.shape_cast %0 : vector<1x22x16xf32> to vector<22x16xf32>
    %c0_2 = arith.constant 0 : index
    %c0_3 = arith.constant 0 : index
    %c0_4 = arith.constant 0 : index
    %2 = vector.load %arg2[%c0_2, %c0_3, %c0_4] : memref<1x22x22xf32, #tpu.memory_space<vmem>>, vector<1x22x22xf32>
    %3 = vector.shape_cast %2 : vector<1x22x22xf32> to vector<22x22xf32>
    %c0_5 = arith.constant 0 : index
    %c0_6 = arith.constant 0 : index
    %4 = vector.load %arg3[%c0_5, %c0_6] : memref<17x102xf32, #tpu.memory_space<vmem>>, vector<17x102xf32>
    %c0_7 = arith.constant 0 : index
    %c0_8 = arith.constant 0 : index
    %5 = vector.load %arg4[%c0_7, %c0_8] : memref<33x103xf32, #tpu.memory_space<vmem>>, vector<33x103xf32>
    %6 = vector.extract_strided_slice %4 {offsets = [0, 0], sizes = [16, 102], strides = [1, 1]} : vector<17x102xf32> to vector<16x102xf32>
    %7 = vector.extract_strided_slice %4 {offsets = [16, 0], sizes = [1, 96], strides = [1, 1]} : vector<17x102xf32> to vector<1x96xf32>
    %cst = arith.constant dense<0.000000e+00> : vector<22x102xf32>
    %8 = tpu.matmul %1, %6, %cst {dimension_numbers = #tpu.dot_dimension_numbers<[1], [0], [0], [1], [0, 0, 1, 1], [], []>} : vector<22x16xf32>, vector<16x102xf32>, vector<22x102xf32> -> vector<22x102xf32>
    %9 = vector.extract_strided_slice %8 {offsets = [0, 96], sizes = [22, 6], strides = [1, 1]} : vector<22x102xf32> to vector<22x6xf32>
    %10 = tpu.transpose %9, [1, 0] : vector<22x6xf32> -> vector<6x22xf32>
    %11 = vector.extract_strided_slice %8 {offsets = [0, 0], sizes = [12, 32], strides = [1, 1]} : vector<22x102xf32> to vector<12x32xf32>
    %12 = vector.extract_strided_slice %10 {offsets = [0, 0], sizes = [1, 12], strides = [1, 1]} : vector<6x22xf32> to vector<1x12xf32>
    %13 = vector.extract_strided_slice %9 {offsets = [0, 1], sizes = [12, 1], strides = [1, 1]} : vector<22x6xf32> to vector<12x1xf32>
    %14 = vector.extract_strided_slice %3 {offsets = [0, 0], sizes = [12, 12], strides = [1, 1]} : vector<22x22xf32> to vector<12x12xf32>
    %15 = vector.extract_strided_slice %7 {offsets = [0, 0], sizes = [1, 32], strides = [1, 1]} : vector<1x96xf32> to vector<1x32xf32>
    %16 = vector.broadcast %13 : vector<12x1xf32> to vector<12x12xf32>
    %17 = vector.broadcast %12 : vector<1x12xf32> to vector<12x12xf32>
    %18 = arith.addf %16, %17 : vector<12x12xf32>
    %cst_9 = arith.constant 2.000000e-01 : f32
    %19 = vector.broadcast %cst_9 : f32 to vector<12x12xf32>
    %20 = arith.mulf %19, %18 : vector<12x12xf32>
    %21 = arith.maximumf %18, %20 : vector<12x12xf32>
    %cst_10 = arith.constant 1.000000e+00 : f32
    %22 = vector.broadcast %cst_10 : f32 to vector<12x12xf32>
    %23 = arith.subf %14, %22 : vector<12x12xf32>
    %cst_11 = arith.constant 1.000000e+30 : f32
    %24 = vector.broadcast %cst_11 : f32 to vector<12x12xf32>
    %25 = arith.mulf %23, %24 : vector<12x12xf32>
    %26 = arith.addf %21, %25 : vector<12x12xf32>
    %cst_12 = arith.constant dense<0xFF800000> : vector<12xf32>
    %27 = vector.multi_reduction <maximumf>, %26, %cst_12 [1] : vector<12x12xf32> to vector<12xf32>
    %28 = vector.shape_cast %27 : vector<12xf32> to vector<12x1xf32>
    %29 = vector.broadcast %28 : vector<12x1xf32> to vector<12x12xf32>
    %30 = arith.subf %26, %29 : vector<12x12xf32>
    %31 = math.exp %30 : vector<12x12xf32>
    %32 = arith.mulf %31, %14 : vector<12x12xf32>
    %cst_13 = arith.constant dense<0.000000e+00> : vector<12xf32>
    %33 = vector.multi_reduction <add>, %32, %cst_13 [1] : vector<12x12xf32> to vector<12xf32>
    %34 = vector.shape_cast %33 : vector<12xf32> to vector<12x1xf32>
    %cst_14 = arith.constant 1.000000e-30 : f32
    %35 = vector.broadcast %cst_14 : f32 to vector<12x1xf32>
    %36 = arith.maximumf %34, %35 : vector<12x1xf32>
    %37 = vector.broadcast %36 : vector<12x1xf32> to vector<12x12xf32>
    %38 = arith.divf %32, %37 : vector<12x12xf32>
    %cst_15 = arith.constant dense<0.000000e+00> : vector<12x32xf32>
    %39 = tpu.matmul %38, %11, %cst_15 {dimension_numbers = #tpu.dot_dimension_numbers<[1], [0], [0], [1], [0, 0, 1, 1], [], []>} : vector<12x12xf32>, vector<12x32xf32>, vector<12x32xf32> -> vector<12x32xf32>
    %40 = vector.broadcast %15 : vector<1x32xf32> to vector<12x32xf32>
    %41 = arith.addf %39, %40 : vector<12x32xf32>
    %42 = vector.extract_strided_slice %8 {offsets = [0, 32], sizes = [12, 32], strides = [1, 1]} : vector<22x102xf32> to vector<12x32xf32>
    %43 = vector.extract_strided_slice %10 {offsets = [2, 0], sizes = [1, 12], strides = [1, 1]} : vector<6x22xf32> to vector<1x12xf32>
    %44 = vector.extract_strided_slice %9 {offsets = [12, 3], sizes = [10, 1], strides = [1, 1]} : vector<22x6xf32> to vector<10x1xf32>
    %45 = vector.extract_strided_slice %3 {offsets = [12, 0], sizes = [10, 12], strides = [1, 1]} : vector<22x22xf32> to vector<10x12xf32>
    %46 = vector.extract_strided_slice %7 {offsets = [0, 32], sizes = [1, 32], strides = [1, 1]} : vector<1x96xf32> to vector<1x32xf32>
    %47 = vector.broadcast %44 : vector<10x1xf32> to vector<10x12xf32>
    %48 = vector.broadcast %43 : vector<1x12xf32> to vector<10x12xf32>
    %49 = arith.addf %47, %48 : vector<10x12xf32>
    %cst_16 = arith.constant 2.000000e-01 : f32
    %50 = vector.broadcast %cst_16 : f32 to vector<10x12xf32>
    %51 = arith.mulf %50, %49 : vector<10x12xf32>
    %52 = arith.maximumf %49, %51 : vector<10x12xf32>
    %cst_17 = arith.constant 1.000000e+00 : f32
    %53 = vector.broadcast %cst_17 : f32 to vector<10x12xf32>
    %54 = arith.subf %45, %53 : vector<10x12xf32>
    %cst_18 = arith.constant 1.000000e+30 : f32
    %55 = vector.broadcast %cst_18 : f32 to vector<10x12xf32>
    %56 = arith.mulf %54, %55 : vector<10x12xf32>
    %57 = arith.addf %52, %56 : vector<10x12xf32>
    %cst_19 = arith.constant dense<0xFF800000> : vector<10xf32>
    %58 = vector.multi_reduction <maximumf>, %57, %cst_19 [1] : vector<10x12xf32> to vector<10xf32>
    %59 = vector.shape_cast %58 : vector<10xf32> to vector<10x1xf32>
    %60 = vector.broadcast %59 : vector<10x1xf32> to vector<10x12xf32>
    %61 = arith.subf %57, %60 : vector<10x12xf32>
    %62 = math.exp %61 : vector<10x12xf32>
    %63 = arith.mulf %62, %45 : vector<10x12xf32>
    %cst_20 = arith.constant dense<0.000000e+00> : vector<10xf32>
    %64 = vector.multi_reduction <add>, %63, %cst_20 [1] : vector<10x12xf32> to vector<10xf32>
    %65 = vector.shape_cast %64 : vector<10xf32> to vector<10x1xf32>
    %cst_21 = arith.constant 1.000000e-30 : f32
    %66 = vector.broadcast %cst_21 : f32 to vector<10x1xf32>
    %67 = arith.maximumf %65, %66 : vector<10x1xf32>
    %68 = vector.broadcast %67 : vector<10x1xf32> to vector<10x12xf32>
    %69 = arith.divf %63, %68 : vector<10x12xf32>
    %cst_22 = arith.constant dense<0.000000e+00> : vector<10x32xf32>
    %70 = tpu.matmul %69, %42, %cst_22 {dimension_numbers = #tpu.dot_dimension_numbers<[1], [0], [0], [1], [0, 0, 1, 1], [], []>} : vector<10x12xf32>, vector<12x32xf32>, vector<10x32xf32> -> vector<10x32xf32>
    %71 = vector.broadcast %46 : vector<1x32xf32> to vector<10x32xf32>
    %72 = arith.addf %70, %71 : vector<10x32xf32>
    %73 = vector.extract_strided_slice %8 {offsets = [12, 64], sizes = [10, 32], strides = [1, 1]} : vector<22x102xf32> to vector<10x32xf32>
    %74 = vector.extract_strided_slice %10 {offsets = [4, 12], sizes = [1, 10], strides = [1, 1]} : vector<6x22xf32> to vector<1x10xf32>
    %75 = vector.extract_strided_slice %9 {offsets = [0, 5], sizes = [12, 1], strides = [1, 1]} : vector<22x6xf32> to vector<12x1xf32>
    %76 = vector.extract_strided_slice %3 {offsets = [0, 12], sizes = [12, 10], strides = [1, 1]} : vector<22x22xf32> to vector<12x10xf32>
    %77 = vector.extract_strided_slice %7 {offsets = [0, 64], sizes = [1, 32], strides = [1, 1]} : vector<1x96xf32> to vector<1x32xf32>
    %78 = vector.broadcast %75 : vector<12x1xf32> to vector<12x10xf32>
    %79 = vector.broadcast %74 : vector<1x10xf32> to vector<12x10xf32>
    %80 = arith.addf %78, %79 : vector<12x10xf32>
    %cst_23 = arith.constant 2.000000e-01 : f32
    %81 = vector.broadcast %cst_23 : f32 to vector<12x10xf32>
    %82 = arith.mulf %81, %80 : vector<12x10xf32>
    %83 = arith.maximumf %80, %82 : vector<12x10xf32>
    %cst_24 = arith.constant 1.000000e+00 : f32
    %84 = vector.broadcast %cst_24 : f32 to vector<12x10xf32>
    %85 = arith.subf %76, %84 : vector<12x10xf32>
    %cst_25 = arith.constant 1.000000e+30 : f32
    %86 = vector.broadcast %cst_25 : f32 to vector<12x10xf32>
    %87 = arith.mulf %85, %86 : vector<12x10xf32>
    %88 = arith.addf %83, %87 : vector<12x10xf32>
    %cst_26 = arith.constant dense<0xFF800000> : vector<12xf32>
    %89 = vector.multi_reduction <maximumf>, %88, %cst_26 [1] : vector<12x10xf32> to vector<12xf32>
    %90 = vector.shape_cast %89 : vector<12xf32> to vector<12x1xf32>
    %91 = vector.broadcast %90 : vector<12x1xf32> to vector<12x10xf32>
    %92 = arith.subf %88, %91 : vector<12x10xf32>
    %93 = math.exp %92 : vector<12x10xf32>
    %94 = arith.mulf %93, %76 : vector<12x10xf32>
    %cst_27 = arith.constant dense<0.000000e+00> : vector<12xf32>
    %95 = vector.multi_reduction <add>, %94, %cst_27 [1] : vector<12x10xf32> to vector<12xf32>
    %96 = vector.shape_cast %95 : vector<12xf32> to vector<12x1xf32>
    %cst_28 = arith.constant 1.000000e-30 : f32
    %97 = vector.broadcast %cst_28 : f32 to vector<12x1xf32>
    %98 = arith.maximumf %96, %97 : vector<12x1xf32>
    %99 = vector.broadcast %98 : vector<12x1xf32> to vector<12x10xf32>
    %100 = arith.divf %94, %99 : vector<12x10xf32>
    %cst_29 = arith.constant dense<0.000000e+00> : vector<12x32xf32>
    %101 = tpu.matmul %100, %73, %cst_29 {dimension_numbers = #tpu.dot_dimension_numbers<[1], [0], [0], [1], [0, 0, 1, 1], [], []>} : vector<12x10xf32>, vector<10x32xf32>, vector<12x32xf32> -> vector<12x32xf32>
    %102 = vector.broadcast %77 : vector<1x32xf32> to vector<12x32xf32>
    %103 = arith.addf %101, %102 : vector<12x32xf32>
    %104 = arith.addf %41, %103 : vector<12x32xf32>
    %cst_30 = arith.constant 0.000000e+00 : f32
    %105 = vector.broadcast %cst_30 : f32 to vector<12x32xf32>
    %106 = arith.cmpf ogt, %104, %105 : vector<12x32xf32>
    %cst_31 = arith.constant 0.000000e+00 : f32
    %107 = vector.broadcast %cst_31 : f32 to vector<12x32xf32>
    %108 = arith.minimumf %104, %107 : vector<12x32xf32>
    %109 = math.exp %108 : vector<12x32xf32>
    %cst_32 = arith.constant 1.000000e+00 : f32
    %110 = vector.broadcast %cst_32 : f32 to vector<12x32xf32>
    %111 = arith.subf %109, %110 : vector<12x32xf32>
    %112 = arith.select %106, %104, %111 : vector<12x32xi1>, vector<12x32xf32>
    %cst_33 = arith.constant 0.000000e+00 : f32
    %113 = vector.broadcast %cst_33 : f32 to vector<10x32xf32>
    %114 = arith.cmpf ogt, %72, %113 : vector<10x32xf32>
    %cst_34 = arith.constant 0.000000e+00 : f32
    %115 = vector.broadcast %cst_34 : f32 to vector<10x32xf32>
    %116 = arith.minimumf %72, %115 : vector<10x32xf32>
    %117 = math.exp %116 : vector<10x32xf32>
    %cst_35 = arith.constant 1.000000e+00 : f32
    %118 = vector.broadcast %cst_35 : f32 to vector<10x32xf32>
    %119 = arith.subf %117, %118 : vector<10x32xf32>
    %120 = arith.select %114, %72, %119 : vector<10x32xi1>, vector<10x32xf32>
    %121 = tpu.concatenate %112, %120 in 0 : vector<12x32xf32>, vector<10x32xf32> -> vector<22x32xf32>
    %122 = vector.extract_strided_slice %5 {offsets = [0, 0], sizes = [32, 102], strides = [1, 1]} : vector<33x103xf32> to vector<32x102xf32>
    %123 = vector.extract_strided_slice %5 {offsets = [32, 0], sizes = [1, 96], strides = [1, 1]} : vector<33x103xf32> to vector<1x96xf32>
    %cst_36 = arith.constant dense<0.000000e+00> : vector<22x102xf32>
    %124 = tpu.matmul %121, %122, %cst_36 {dimension_numbers = #tpu.dot_dimension_numbers<[1], [0], [0], [1], [0, 0, 1, 1], [], []>} : vector<22x32xf32>, vector<32x102xf32>, vector<22x102xf32> -> vector<22x102xf32>
    %125 = vector.extract_strided_slice %124 {offsets = [0, 96], sizes = [22, 6], strides = [1, 1]} : vector<22x102xf32> to vector<22x6xf32>
    %126 = tpu.transpose %125, [1, 0] : vector<22x6xf32> -> vector<6x22xf32>
    %127 = vector.extract_strided_slice %124 {offsets = [0, 0], sizes = [12, 32], strides = [1, 1]} : vector<22x102xf32> to vector<12x32xf32>
    %128 = vector.extract_strided_slice %126 {offsets = [0, 0], sizes = [1, 12], strides = [1, 1]} : vector<6x22xf32> to vector<1x12xf32>
    %129 = vector.extract_strided_slice %125 {offsets = [0, 1], sizes = [12, 1], strides = [1, 1]} : vector<22x6xf32> to vector<12x1xf32>
    %130 = vector.extract_strided_slice %3 {offsets = [0, 0], sizes = [12, 12], strides = [1, 1]} : vector<22x22xf32> to vector<12x12xf32>
    %131 = vector.extract_strided_slice %123 {offsets = [0, 0], sizes = [1, 32], strides = [1, 1]} : vector<1x96xf32> to vector<1x32xf32>
    %132 = vector.broadcast %129 : vector<12x1xf32> to vector<12x12xf32>
    %133 = vector.broadcast %128 : vector<1x12xf32> to vector<12x12xf32>
    %134 = arith.addf %132, %133 : vector<12x12xf32>
    %cst_37 = arith.constant 2.000000e-01 : f32
    %135 = vector.broadcast %cst_37 : f32 to vector<12x12xf32>
    %136 = arith.mulf %135, %134 : vector<12x12xf32>
    %137 = arith.maximumf %134, %136 : vector<12x12xf32>
    %cst_38 = arith.constant 1.000000e+00 : f32
    %138 = vector.broadcast %cst_38 : f32 to vector<12x12xf32>
    %139 = arith.subf %130, %138 : vector<12x12xf32>
    %cst_39 = arith.constant 1.000000e+30 : f32
    %140 = vector.broadcast %cst_39 : f32 to vector<12x12xf32>
    %141 = arith.mulf %139, %140 : vector<12x12xf32>
    %142 = arith.addf %137, %141 : vector<12x12xf32>
    %cst_40 = arith.constant dense<0xFF800000> : vector<12xf32>
    %143 = vector.multi_reduction <maximumf>, %142, %cst_40 [1] : vector<12x12xf32> to vector<12xf32>
    %144 = vector.shape_cast %143 : vector<12xf32> to vector<12x1xf32>
    %145 = vector.broadcast %144 : vector<12x1xf32> to vector<12x12xf32>
    %146 = arith.subf %142, %145 : vector<12x12xf32>
    %147 = math.exp %146 : vector<12x12xf32>
    %148 = arith.mulf %147, %130 : vector<12x12xf32>
    %cst_41 = arith.constant dense<0.000000e+00> : vector<12xf32>
    %149 = vector.multi_reduction <add>, %148, %cst_41 [1] : vector<12x12xf32> to vector<12xf32>
    %150 = vector.shape_cast %149 : vector<12xf32> to vector<12x1xf32>
    %cst_42 = arith.constant 1.000000e-30 : f32
    %151 = vector.broadcast %cst_42 : f32 to vector<12x1xf32>
    %152 = arith.maximumf %150, %151 : vector<12x1xf32>
    %153 = vector.broadcast %152 : vector<12x1xf32> to vector<12x12xf32>
    %154 = arith.divf %148, %153 : vector<12x12xf32>
    %cst_43 = arith.constant dense<0.000000e+00> : vector<12x32xf32>
    %155 = tpu.matmul %154, %127, %cst_43 {dimension_numbers = #tpu.dot_dimension_numbers<[1], [0], [0], [1], [0, 0, 1, 1], [], []>} : vector<12x12xf32>, vector<12x32xf32>, vector<12x32xf32> -> vector<12x32xf32>
    %156 = vector.broadcast %131 : vector<1x32xf32> to vector<12x32xf32>
    %157 = arith.addf %155, %156 : vector<12x32xf32>
    %158 = vector.extract_strided_slice %124 {offsets = [0, 32], sizes = [12, 32], strides = [1, 1]} : vector<22x102xf32> to vector<12x32xf32>
    %159 = vector.extract_strided_slice %126 {offsets = [2, 0], sizes = [1, 12], strides = [1, 1]} : vector<6x22xf32> to vector<1x12xf32>
    %160 = vector.extract_strided_slice %125 {offsets = [12, 3], sizes = [10, 1], strides = [1, 1]} : vector<22x6xf32> to vector<10x1xf32>
    %161 = vector.extract_strided_slice %3 {offsets = [12, 0], sizes = [10, 12], strides = [1, 1]} : vector<22x22xf32> to vector<10x12xf32>
    %162 = vector.extract_strided_slice %123 {offsets = [0, 32], sizes = [1, 32], strides = [1, 1]} : vector<1x96xf32> to vector<1x32xf32>
    %163 = vector.broadcast %160 : vector<10x1xf32> to vector<10x12xf32>
    %164 = vector.broadcast %159 : vector<1x12xf32> to vector<10x12xf32>
    %165 = arith.addf %163, %164 : vector<10x12xf32>
    %cst_44 = arith.constant 2.000000e-01 : f32
    %166 = vector.broadcast %cst_44 : f32 to vector<10x12xf32>
    %167 = arith.mulf %166, %165 : vector<10x12xf32>
    %168 = arith.maximumf %165, %167 : vector<10x12xf32>
    %cst_45 = arith.constant 1.000000e+00 : f32
    %169 = vector.broadcast %cst_45 : f32 to vector<10x12xf32>
    %170 = arith.subf %161, %169 : vector<10x12xf32>
    %cst_46 = arith.constant 1.000000e+30 : f32
    %171 = vector.broadcast %cst_46 : f32 to vector<10x12xf32>
    %172 = arith.mulf %170, %171 : vector<10x12xf32>
    %173 = arith.addf %168, %172 : vector<10x12xf32>
    %cst_47 = arith.constant dense<0xFF800000> : vector<10xf32>
    %174 = vector.multi_reduction <maximumf>, %173, %cst_47 [1] : vector<10x12xf32> to vector<10xf32>
    %175 = vector.shape_cast %174 : vector<10xf32> to vector<10x1xf32>
    %176 = vector.broadcast %175 : vector<10x1xf32> to vector<10x12xf32>
    %177 = arith.subf %173, %176 : vector<10x12xf32>
    %178 = math.exp %177 : vector<10x12xf32>
    %179 = arith.mulf %178, %161 : vector<10x12xf32>
    %cst_48 = arith.constant dense<0.000000e+00> : vector<10xf32>
    %180 = vector.multi_reduction <add>, %179, %cst_48 [1] : vector<10x12xf32> to vector<10xf32>
    %181 = vector.shape_cast %180 : vector<10xf32> to vector<10x1xf32>
    %cst_49 = arith.constant 1.000000e-30 : f32
    %182 = vector.broadcast %cst_49 : f32 to vector<10x1xf32>
    %183 = arith.maximumf %181, %182 : vector<10x1xf32>
    %184 = vector.broadcast %183 : vector<10x1xf32> to vector<10x12xf32>
    %185 = arith.divf %179, %184 : vector<10x12xf32>
    %cst_50 = arith.constant dense<0.000000e+00> : vector<10x32xf32>
    %186 = tpu.matmul %185, %158, %cst_50 {dimension_numbers = #tpu.dot_dimension_numbers<[1], [0], [0], [1], [0, 0, 1, 1], [], []>} : vector<10x12xf32>, vector<12x32xf32>, vector<10x32xf32> -> vector<10x32xf32>
    %187 = vector.broadcast %162 : vector<1x32xf32> to vector<10x32xf32>
    %188 = arith.addf %186, %187 : vector<10x32xf32>
    %189 = vector.extract_strided_slice %124 {offsets = [12, 64], sizes = [10, 32], strides = [1, 1]} : vector<22x102xf32> to vector<10x32xf32>
    %190 = vector.extract_strided_slice %126 {offsets = [4, 12], sizes = [1, 10], strides = [1, 1]} : vector<6x22xf32> to vector<1x10xf32>
    %191 = vector.extract_strided_slice %125 {offsets = [0, 5], sizes = [12, 1], strides = [1, 1]} : vector<22x6xf32> to vector<12x1xf32>
    %192 = vector.extract_strided_slice %3 {offsets = [0, 12], sizes = [12, 10], strides = [1, 1]} : vector<22x22xf32> to vector<12x10xf32>
    %193 = vector.extract_strided_slice %123 {offsets = [0, 64], sizes = [1, 32], strides = [1, 1]} : vector<1x96xf32> to vector<1x32xf32>
    %194 = vector.broadcast %191 : vector<12x1xf32> to vector<12x10xf32>
    %195 = vector.broadcast %190 : vector<1x10xf32> to vector<12x10xf32>
    %196 = arith.addf %194, %195 : vector<12x10xf32>
    %cst_51 = arith.constant 2.000000e-01 : f32
    %197 = vector.broadcast %cst_51 : f32 to vector<12x10xf32>
    %198 = arith.mulf %197, %196 : vector<12x10xf32>
    %199 = arith.maximumf %196, %198 : vector<12x10xf32>
    %cst_52 = arith.constant 1.000000e+00 : f32
    %200 = vector.broadcast %cst_52 : f32 to vector<12x10xf32>
    %201 = arith.subf %192, %200 : vector<12x10xf32>
    %cst_53 = arith.constant 1.000000e+30 : f32
    %202 = vector.broadcast %cst_53 : f32 to vector<12x10xf32>
    %203 = arith.mulf %201, %202 : vector<12x10xf32>
    %204 = arith.addf %199, %203 : vector<12x10xf32>
    %cst_54 = arith.constant dense<0xFF800000> : vector<12xf32>
    %205 = vector.multi_reduction <maximumf>, %204, %cst_54 [1] : vector<12x10xf32> to vector<12xf32>
    %206 = vector.shape_cast %205 : vector<12xf32> to vector<12x1xf32>
    %207 = vector.broadcast %206 : vector<12x1xf32> to vector<12x10xf32>
    %208 = arith.subf %204, %207 : vector<12x10xf32>
    %209 = math.exp %208 : vector<12x10xf32>
    %210 = arith.mulf %209, %192 : vector<12x10xf32>
    %cst_55 = arith.constant dense<0.000000e+00> : vector<12xf32>
    %211 = vector.multi_reduction <add>, %210, %cst_55 [1] : vector<12x10xf32> to vector<12xf32>
    %212 = vector.shape_cast %211 : vector<12xf32> to vector<12x1xf32>
    %cst_56 = arith.constant 1.000000e-30 : f32
    %213 = vector.broadcast %cst_56 : f32 to vector<12x1xf32>
    %214 = arith.maximumf %212, %213 : vector<12x1xf32>
    %215 = vector.broadcast %214 : vector<12x1xf32> to vector<12x10xf32>
    %216 = arith.divf %210, %215 : vector<12x10xf32>
    %cst_57 = arith.constant dense<0.000000e+00> : vector<12x32xf32>
    %217 = tpu.matmul %216, %189, %cst_57 {dimension_numbers = #tpu.dot_dimension_numbers<[1], [0], [0], [1], [0, 0, 1, 1], [], []>} : vector<12x10xf32>, vector<10x32xf32>, vector<12x32xf32> -> vector<12x32xf32>
    %218 = vector.broadcast %193 : vector<1x32xf32> to vector<12x32xf32>
    %219 = arith.addf %217, %218 : vector<12x32xf32>
    %220 = arith.addf %157, %219 : vector<12x32xf32>
    %cst_58 = arith.constant dense<0.000000e+00> : vector<32xf32>
    %221 = vector.multi_reduction <add>, %220, %cst_58 [0] : vector<12x32xf32> to vector<32xf32>
    %222 = vector.shape_cast %221 : vector<32xf32> to vector<1x32xf32>
    %cst_59 = arith.constant 0.0833333358 : f32
    %223 = vector.broadcast %cst_59 : f32 to vector<1x32xf32>
    %224 = arith.mulf %222, %223 : vector<1x32xf32>
    %cst_60 = arith.constant dense<0.000000e+00> : vector<32xf32>
    %225 = vector.multi_reduction <add>, %188, %cst_60 [0] : vector<10x32xf32> to vector<32xf32>
    %226 = vector.shape_cast %225 : vector<32xf32> to vector<1x32xf32>
    %cst_61 = arith.constant 1.000000e-01 : f32
    %227 = vector.broadcast %cst_61 : f32 to vector<1x32xf32>
    %228 = arith.mulf %226, %227 : vector<1x32xf32>
    %229 = arith.addf %224, %228 : vector<1x32xf32>
    %230 = vector.extract_strided_slice %5 {offsets = [0, 102], sizes = [32, 1], strides = [1, 1]} : vector<33x103xf32> to vector<32x1xf32>
    %231 = vector.extract_strided_slice %5 {offsets = [32, 102], sizes = [1, 1], strides = [1, 1]} : vector<33x103xf32> to vector<1x1xf32>
    %cst_62 = arith.constant dense<0.000000e+00> : vector<1x1xf32>
    %232 = tpu.matmul %229, %230, %cst_62 {dimension_numbers = #tpu.dot_dimension_numbers<[1], [0], [0], [1], [0, 0, 1, 1], [], []>} : vector<1x32xf32>, vector<32x1xf32>, vector<1x1xf32> -> vector<1x1xf32>
    %233 = arith.addf %232, %231 : vector<1x1xf32>
    %234 = arith.negf %233 : vector<1x1xf32>
    %235 = math.exp %234 : vector<1x1xf32>
    %cst_63 = arith.constant 1.000000e+00 : f32
    %236 = vector.broadcast %cst_63 : f32 to vector<1x1xf32>
    %237 = arith.addf %236, %235 : vector<1x1xf32>
    %238 = arith.divf %236, %237 : vector<1x1xf32>
    %c0_64 = arith.constant 0 : index
    %c0_65 = arith.constant 0 : index
    %c0_66 = arith.constant 0 : index
    %239 = vector.load %arg5[%c0_64, %c0_65, %c0_66] : memref<1x1x1xf32, #tpu.memory_space<vmem>>, vector<1x1x1xf32>
    %240 = vector.shape_cast %239 : vector<1x1x1xf32> to vector<1x1xf32>
    %241 = vector.shape_cast %238 : vector<1x1xf32> to vector<1x1x1xf32>
    tpu.vector_store %arg5[%c0_64, %c0_65, %c0_66], %241 {strides = array<i32>} : memref<1x1x1xf32, #tpu.memory_space<vmem>>, vector<1x1x1xf32>,
    return
  }
  func.func @transform_0(%arg0: i32) -> (i32, i32, i32) {
    %c0_i32 = arith.constant 0 : i32
    %c0_i32_0 = arith.constant 0 : i32
    %c0_i32_1 = arith.constant 0 : i32
    return %arg0, %c0_i32, %c0_i32_0 : i32, i32, i32
  }
  func.func @transform_1(%arg0: i32) -> (i32, i32, i32) {
    %c0_i32 = arith.constant 0 : i32
    %c0_i32_0 = arith.constant 0 : i32
    %c0_i32_1 = arith.constant 0 : i32
    return %arg0, %c0_i32, %c0_i32_0 : i32, i32, i32
  }
  func.func @transform_2(%arg0: i32) -> (i32, i32) {
    %c0_i32 = arith.constant 0 : i32
    %c0_i32_0 = arith.constant 0 : i32
    %c0_i32_1 = arith.constant 0 : i32
    return %c0_i32, %c0_i32_0 : i32, i32
  }
  func.func @transform_3(%arg0: i32) -> (i32, i32) {
    %c0_i32 = arith.constant 0 : i32
    %c0_i32_0 = arith.constant 0 : i32
    %c0_i32_1 = arith.constant 0 : i32
    return %c0_i32, %c0_i32_0 : i32, i32
  }
  func.func @transform_4(%arg0: i32) -> (i32, i32, i32) {
    %c0_i32 = arith.constant 0 : i32
    %c0_i32_0 = arith.constant 0 : i32
    %c0_i32_1 = arith.constant 0 : i32
    return %arg0, %c0_i32, %c0_i32_0 : i32, i32, i32
  }
}

</mosaic_0001>

<llo_original>
// kernel: forward.1
$region0: #{forward.1}
  #allocation0 [shape = 'u32[]', space=smem, size = 0x4, offset = 0x4, fixed_abs, tag = 'smem constant byte address 0x4 - core index']
  #allocation1 [shape = 'u32[144,128]{1,0:T(1,128)}', space=vmem, size = 0x12000, scoped, tag = 'internal scratch']
  %s0 = inlined_call_operand.vmem [shape: f32[8,22,16], index: 0, kind: input, shape index: {}]
  %s1 = inlined_call_operand.vmem [shape: f32[8,22,22], index: 1, kind: input, shape index: {}]
  %s2 = inlined_call_operand.vmem [shape: f32[17,102], index: 2, kind: input, shape index: {}]
  %s3 = inlined_call_operand.vmem [shape: f32[33,103], index: 3, kind: input, shape index: {}]
  %s4 = inlined_call_operand.vmem [shape: f32[8,1,1], index: 4, kind: output, shape index: {}]
  %s5 = sld [smem:[#allocation0]]
  $region49: #{forward.1} parent=0
    _
  %s7 = ssub.s32 1, %s5
  %s8 = scalar_select 0, %s7, %s5
  loop: start=0, step=1, limit=10
  $region2: #{forward.1} parent=0 // loop_pre_header
    _
  $region3: #{forward.1} parent=0 // loop_header
    %s10 = sphi 0, %s14
    %p11 = scmp.ge.s32.totalorder %s10, 10
    %s20 = sphi 0, %s22
    %s23 = sphi 0, %s20
    %s24 = sphi 0, %s23
    %s40 = sphi 0, %s24
    %s46 = sphi 0, %s48
    %s49 = sphi 0, %s46
    %s50 = sphi 0, %s49
    %s66 = sphi 0, %s50
    %s70 = sphi 0, %s70
    %s72 = sphi 0, %s70
    %s73 = sphi 0, %s72
    %s87 = sphi 0, %s73
    %s91 = sphi 0, %s91
    %s93 = sphi 0, %s91
    %s94 = sphi 0, %s93
    %s108 = sphi 0, %s94
    %s114 = sphi 0, %s116
    %s117 = sphi 0, %s114
    %s118 = sphi 0, %s117
    %s134 = sphi 0, %s118
  $region4: #{forward.1} parent=0 // loop_header_branch
    %13 = sbr.rel (%p11) target = $region8
  $region5: #{forward.1} parent=0 // loop_body
    %s15 = ssub.s32 %s10, 1
    %s16 = ssub.s32 %s10, 2
    %s17 = sadd.s32 %s10, 1
    %s18 = ssub.s32 %s10, %s17
    %p19 = scmp.eq.s32.totalorder %s18, 0
    %s21 = sadd.s32 %s20, 1
    %s22 = scalar_select %p19, %s20, %s21
    %p25 = pneg %p19
    %p26 = scmp.eq.s32.totalorder %s10, 7
    %p27 = por %p25, %p26
    %p28 = scmp.ne.s32.totalorder %s20, %s23
    %p29 = scmp.eq.s32.totalorder %s10, 0
    %p30 = por %p28, %p29
    %p31 = scmp.ne.s32.totalorder %s20, %s23
    %p32 = scmp.eq.s32.totalorder %s15, 7
    %p33 = por %p31, %p32
    %p34 = scmp.ne.s32.totalorder %s23, %s24
    %p35 = scmp.eq.s32.totalorder %s15, 0
    %p36 = por %p34, %p35
    %p37 = scmp.ne.s32.totalorder %s23, %s24
    %p38 = scmp.eq.s32.totalorder %s16, 7
    %p39 = por %p37, %p38
    %p41 = scmp.ne.s32.totalorder %s24, %s40
    %p42 = scmp.eq.s32.totalorder %s16, 0
    %p43 = por %p41, %p42
    %s44 = ssub.s32 %s10, %s17
    %p45 = scmp.eq.s32.totalorder %s44, 0
    %s47 = sadd.s32 %s46, 1
    %s48 = scalar_select %p45, %s46, %s47
    %p51 = pneg %p45
    %p52 = scmp.eq.s32.totalorder %s10, 7
    %p53 = por %p51, %p52
    %p54 = scmp.ne.s32.totalorder %s46, %s49
    %p55 = scmp.eq.s32.totalorder %s10, 0
    %p56 = por %p54, %p55
    %p57 = scmp.ne.s32.totalorder %s46, %s49
    %p58 = scmp.eq.s32.totalorder %s15, 7
    %p59 = por %p57, %p58
    %p60 = scmp.ne.s32.totalorder %s49, %s50
    %p61 = scmp.eq.s32.totalorder %s15, 0
    %p62 = por %p60, %p61
    %p63 = scmp.ne.s32.totalorder %s49, %s50
    %p64 = scmp.eq.s32.totalorder %s16, 7
    %p65 = por %p63, %p64
    %p67 = scmp.ne.s32.totalorder %s50, %s66
    %p68 = scmp.eq.s32.totalorder %s16, 0
    %p69 = por %p67, %p68
    %s71 = sadd.s32 %s70, 1
    %p74 = scmp.eq.s32.totalorder %s10, 7
    %p75 = scmp.ne.s32.totalorder %s70, %s72
    %p76 = scmp.eq.s32.totalorder %s10, 0
    %p77 = por %p75, %p76
    %p78 = scmp.ne.s32.totalorder %s70, %s72
    %p79 = scmp.eq.s32.totalorder %s15, 7
    %p80 = por %p78, %p79
    %p81 = scmp.ne.s32.totalorder %s72, %s73
    %p82 = scmp.eq.s32.totalorder %s15, 0
    %p83 = por %p81, %p82
    %p84 = scmp.ne.s32.totalorder %s72, %s73
    %p85 = scmp.eq.s32.totalorder %s16, 7
    %p86 = por %p84, %p85
    %p88 = scmp.ne.s32.totalorder %s73, %s87
    %p89 = scmp.eq.s32.totalorder %s16, 0
    %p90 = por %p88, %p89
    %s92 = sadd.s32 %s91, 1
    %p95 = scmp.eq.s32.totalorder %s10, 7
    %p96 = scmp.ne.s32.totalorder %s91, %s93
    %p97 = scmp.eq.s32.totalorder %s10, 0
    %p98 = por %p96, %p97
    %p99 = scmp.ne.s32.totalorder %s91, %s93
    %p100 = scmp.eq.s32.totalorder %s15, 7
    %p101 = por %p99, %p100
    %p102 = scmp.ne.s32.totalorder %s93, %s94
    %p103 = scmp.eq.s32.totalorder %s15, 0
    %p104 = por %p102, %p103
    %p105 = scmp.ne.s32.totalorder %s93, %s94
    %p106 = scmp.eq.s32.totalorder %s16, 7
    %p107 = por %p105, %p106
    %p109 = scmp.ne.s32.totalorder %s94, %s108
    %p110 = scmp.eq.s32.totalorder %s16, 0
    %p111 = por %p109, %p110
    %s112 = ssub.s32 %s10, %s17
    %p113 = scmp.eq.s32.totalorder %s112, 0
    %s115 = sadd.s32 %s114, 1
    %s116 = scalar_select %p113, %s114, %s115
    %p119 = pneg %p113
    %p120 = scmp.eq.s32.totalorder %s10, 7
    %p121 = por %p119, %p120
    %p122 = scmp.ne.s32.totalorder %s114, %s117
    %p123 = scmp.eq.s32.totalorder %s10, 0
    %p124 = por %p122, %p123
    %p125 = scmp.ne.s32.totalorder %s114, %s117
    %p126 = scmp.eq.s32.totalorder %s15, 7
    %p127 = por %p125, %p126
    %p128 = scmp.ne.s32.totalorder %s117, %s118
    %p129 = scmp.eq.s32.totalorder %s15, 0
    %p130 = por %p128, %p129
    %p131 = scmp.ne.s32.totalorder %s117, %s118
    %p132 = scmp.eq.s32.totalorder %s16, 7
    %p133 = por %p131, %p132
    %p135 = scmp.ne.s32.totalorder %s118, %s134
    %p136 = scmp.eq.s32.totalorder %s16, 0
    %p137 = por %p135, %p136
    %p138 = scmp.le.s32.totalorder 1, %s10
    %p139 = scmp.lt.s32.totalorder %s10, 9
    %p140 = pnand %p138, %p139
    %p141 = pneg %p140
    // Predicated region
    $region9: #{forward.1} parent=5 // pred_check
      _
    $region10: #{forward.1} parent=5 // pred_check_branch
      %143 = sbr.rel (%p140) target = $region12
    $region11: #{forward.1} parent=5 // pred_region
      %s144 = ssub.s32 %s10, 1
      // Predicated region
      $region13: #{forward.1} parent=11 // pred_check
        %p145 = pneg %p83
      $region14: #{forward.1} parent=11 // pred_check_branch
        %147 = sbr.rel (%p145) target = $region16
      $region15: #{forward.1} parent=11 // pred_region
        _
      $region16: #{forward.1} parent=11 // pred_fallthru
        _
      // Predicated region
      $region17: #{forward.1} parent=11 // pred_check
        %p148 = pneg %p104
      $region18: #{forward.1} parent=11 // pred_check_branch
        %150 = sbr.rel (%p148) target = $region20
      $region19: #{forward.1} parent=11 // pred_region
        _
      $region20: #{forward.1} parent=11 // pred_fallthru
        _
    $region12: #{forward.1} parent=5 // pred_fallthru
      _
    %p151 = scmp.lt.s32.totalorder %s10, 8
    // Predicated region
    $region21: #{forward.1} parent=5 // pred_check
      %p152 = pneg %p151
    $region22: #{forward.1} parent=5 // pred_check_branch
      %154 = sbr.rel (%p152) target = $region24
    $region23: #{forward.1} parent=5 // pred_region
      // Predicated region
      $region25: #{forward.1} parent=23 // pred_check
        %p155 = pneg %p30
      $region26: #{forward.1} parent=23 // pred_check_branch
        %157 = sbr.rel (%p155) target = $region28
      $region27: #{forward.1} parent=23 // pred_region
        %p158 = scmp.lt.s32.totalorder %s10, 7
        %s159 = scalar_select %p158, %s10, 7
        %s160 = smul.addr %s159, 3
        %s161 = smul.addr %s160, 8
        %s162 = scalar_lea.vmem %s0, %s161
      $region28: #{forward.1} parent=23 // pred_fallthru
        _
      // Predicated region
      $region29: #{forward.1} parent=23 // pred_check
        %p163 = pneg %p56
      $region30: #{forward.1} parent=23 // pred_check_branch
        %165 = sbr.rel (%p163) target = $region32
      $region31: #{forward.1} parent=23 // pred_region
        %p166 = scmp.lt.s32.totalorder %s10, 7
        %s167 = scalar_select %p166, %s10, 7
        %s168 = smul.addr %s167, 3
        %s169 = smul.addr %s168, 8
        %s170 = scalar_lea.vmem %s1, %s169
      $region32: #{forward.1} parent=23 // pred_fallthru
        _
    $region24: #{forward.1} parent=5 // pred_fallthru
      _
    %p171 = scmp.le.s32.totalorder 1, %s10
    %p172 = scmp.lt.s32.totalorder %s10, 9
    %p173 = pnand %p171, %p172
    %p174 = pneg %p173
    // Predicated region
    $region33: #{forward.1} parent=5 // pred_check
      _
    $region34: #{forward.1} parent=5 // pred_check_branch
      %176 = sbr.rel (%p173) target = $region36
    $region35: #{forward.1} parent=5 // pred_region
      %s177 = ssub.s32 %s10, 1
      %p178 = scmp.lt.s32.totalorder %s15, 7
      %s179 = scalar_select %p178, %s15, 7
      %s180 = smul.addr %s179, 3
      %s181 = smul.addr %s180, 8
      %s182 = scalar_lea.vmem %s0, %s181
      %p183 = pneg %p36
      %p184 = pneg %p33
      %p185 = scmp.lt.s32.totalorder %s15, 7
      %s186 = scalar_select %p185, %s15, 7
      %s187 = smul.addr %s186, 3
      %s188 = smul.addr %s187, 8
      %s189 = scalar_lea.vmem %s1, %s188
      %p190 = pneg %p62
      %p191 = pneg %p59
      %p192 = pneg %p83
      %p193 = pneg %p80
      %p194 = pneg %p104
      %p195 = pneg %p101
      %p196 = pneg %p130
      %p197 = pneg %p127
      %p198 = scmp.lt.s32.totalorder %s15, 7
      %s199 = scalar_select %p198, %s15, 7
      %s200 = scalar_lea.vmem %s4, %s199
      %p201 = scmp.lt.s32.totalorder %s15, 7
      %s202 = scalar_select %p201, %s15, 7
      %s203 = smul.addr %s202, 3
      %s204 = smul.addr %s203, 8
      %s205 = scalar_lea.vmem %s0, %s204
      %p206 = scmp.lt.s32.totalorder %s15, 7
      %s207 = scalar_select %p206, %s15, 7
      %s208 = smul.addr %s207, 3
      %s209 = smul.addr %s208, 8
      %s210 = scalar_lea.vmem %s1, %s209
      %p211 = scmp.lt.s32.totalorder %s15, 7
      %s212 = scalar_select %p211, %s15, 7
      %s213 = scalar_lea.vmem %s4, %s212
      %v214 = vld [vmem:[%s205] sm:$0xff]
      %v215 = vld [vmem:[%s205 + $0x8] sm:$0xff]
      %v216 = vld [vmem:[%s205 + $0x10] sm:$0x3f]
      %v217 = vld [vmem:[%s210] sm:$0xff]
      %v218 = vld [vmem:[%s210 + $0x8] sm:$0xff]
      %v219 = vld [vmem:[%s210 + $0x10] sm:$0x3f]
      %v220 = vld [vmem:[%s2] sm:$0xff]
      %v221 = vld [vmem:[%s2 + $0x8] sm:$0xff]
      %v222 = vld [vmem:[%s2 + $0x10] sm:$0x1]
      %v223 = vld [vmem:[%s3] sm:$0xff]
      %v224 = vld [vmem:[%s3 + $0x8] sm:$0xff]
      %v225 = vld [vmem:[%s3 + $0x10] sm:$0xff]
      %v226 = vld [vmem:[%s3 + $0x18] sm:$0xff]
      %v227 = vld [vmem:[%s3 + $0x20] sm:$0x1]
      %vm228 = vcmask 130048
      %v230 = vsel %vm228, %v214, 0
      %v233 = vsel %vm228, %v215, 0
      %v236 = vsel %vm228, %v216, 0
      %238 = vmatprep.subr.mxu0 0.0
      %239 = vmatpush1.msra.mxu0 0.0
      %240 = vmatprep.subr.mxu0 0.0
      %241 = vmatpush1.msra.mxu0 0.0
      %242 = vmatprep.subr.mxu0 0.0
      %243 = vmatpush1.msra.mxu0 0.0
      %244 = vmatprep.subr.mxu0 0.0
      %245 = vmatpush1.msra.mxu0 0.0
      %246 = vmatprep.subr.mxu0 0.0
      %247 = vmatpush1.msra.mxu0 0.0
      %248 = vmatprep.subr.mxu0 0.0
      %249 = vmatpush1.msra.mxu0 0.0
      %250 = vmatprep.subr.mxu0 0.0
      %251 = vmatpush1.msra.mxu0 0.0
      %252 = vmatprep.subr.mxu0 0.0
      %253 = vmatpush1.msra.mxu0 0.0
      %254 = vmatprep.subr.mxu0 0.0
      %255 = vmatpush1.msra.mxu0 0.0
      %256 = vmatprep.subr.mxu0 0.0
      %257 = vmatpush1.msra.mxu0 0.0
      %258 = vmatprep.subr.mxu0 0.0
      %259 = vmatpush1.msra.mxu0 0.0
      %260 = vmatprep.subr.mxu0 0.0
      %261 = vmatpush1.msra.mxu0 0.0
      %262 = vmatprep.subr.mxu0 0.0
      %263 = vmatpush1.msra.mxu0 0.0
      %264 = vmatprep.subr.mxu0 0.0
      %265 = vmatpush1.msra.mxu0 0.0
      %266 = vmatprep.subr.mxu0 0.0
      %267 = vmatpush1.msra.mxu0 %v221
      %268 = vmatprep.subr.mxu0 0.0
      %269 = vmatpush1.msra.mxu0 %v220
      %270 = vmatprep.subr.mxu0 0.0
      %271 = vmatpush2.msra.mxu0 0.0
      %272 = vmatprep.subr.mxu0 0.0
      %273 = vmatpush2.msra.mxu0 0.0
      %274 = vmatprep.subr.mxu0 0.0
      %275 = vmatpush2.msra.mxu0 0.0
      %276 = vmatprep.subr.mxu0 0.0
      %277 = vmatpush2.msra.mxu0 0.0
      %278 = vmatprep.subr.mxu0 0.0
      %279 = vmatpush2.msra.mxu0 0.0
      %280 = vmatprep.subr.mxu0 0.0
      %281 = vmatpush2.msra.mxu0 0.0
      %282 = vmatprep.subr.mxu0 0.0
      %283 = vmatpush2.msra.mxu0 0.0
      %284 = vmatprep.subr.mxu0 0.0
      %285 = vmatpush2.msra.mxu0 0.0
      %286 = vmatprep.subr.mxu0 0.0
      %287 = vmatpush2.msra.mxu0 0.0
      %288 = vmatprep.subr.mxu0 0.0
      %289 = vmatpush2.msra.mxu0 0.0
      %290 = vmatprep.subr.mxu0 0.0
      %291 = vmatpush2.msra.mxu0 0.0
      %292 = vmatprep.subr.mxu0 0.0
      %293 = vmatpush2.msra.mxu0 0.0
      %294 = vmatprep.subr.mxu0 0.0
      %295 = vmatpush2.msra.mxu0 0.0
      %296 = vmatprep.subr.mxu0 0.0
      %297 = vmatpush2.msra.mxu0 0.0
      %298 = vmatprep.subr.mxu0 0.0
      %299 = vmatpush2.msra.mxu0 0.0
      %300 = vmatprep.subr.mxu0 0.0
      %301 = vmatpush2.msra.mxu0 0.0
      %302 = vmatprep.mubr.f32.mxu0 0.0
      %303 = vmatmul.mubr.f32.gmra.mxu0 %v230
      %v304 = vpop.f32.mrf.mxu0
      %v305 = vadd.f32 0.0, %v304
      %v306 = vpop.f32.mrf.mxu0
      %307 = vmatprep.mubr.f32.mxu0 0.0
      %308 = vmatmul.mubr.f32.gmra.mxu0 %v233
      %v309 = vpop.f32.mrf.mxu0
      %v310 = vadd.f32 0.0, %v309
      %v311 = vpop.f32.mrf.mxu0
      %312 = vmatprep.mubr.f32.mxu0 0.0
      %313 = vmatmul.mubr.f32.gmra.mxu0 %v236
      %v314 = vpop.f32.mrf.mxu0
      %v315 = vadd.f32 0.0, %v314
      %v316 = vpop.f32.mrf.mxu0
      %317 = vdwg.mxu0
      %321 = vrot.lane.b32.xlu0 %v305, 32
      %v322 = vpop.permute.xlu0 %321
      %323 = vrot.lane.b32.xlu0 %v310, 32
      %v324 = vpop.permute.xlu0 %323
      %325 = vrot.lane.b32.xlu0 %v315, 32
      %v326 = vpop.permute.xlu0 %325
      %330 = vxpose.xlu0.b32.start [1/16] %v322, 128
      %331 = vxpose.xlu0.b32.cont [2/16] %v324, 128
      %332 = vxpose.xlu0.b32.cont [3/16] %v326, 128
      %333 = vxpose.xlu0.b32.cont [4/16] 0.0, 128
      %334 = vxpose.xlu0.b32.cont [5/16] 0.0, 128
      %335 = vxpose.xlu0.b32.cont [6/16] 0.0, 128
      %336 = vxpose.xlu0.b32.cont [7/16] 0.0, 128
      %337 = vxpose.xlu0.b32.cont [8/16] 0.0, 128
      %338 = vxpose.xlu0.b32.cont [9/16] 0.0, 128
      %339 = vxpose.xlu0.b32.cont [10/16] 0.0, 128
      %340 = vxpose.xlu0.b32.cont [11/16] 0.0, 128
      %341 = vxpose.xlu0.b32.cont [12/16] 0.0, 128
      %342 = vxpose.xlu0.b32.cont [13/16] 0.0, 128
      %343 = vxpose.xlu0.b32.cont [14/16] 0.0, 128
      %344 = vxpose.xlu0.b32.cont [15/16] 0.0, 128
      %345 = vxpose.xlu0.b32.end [16/16] 0.0, 128
      %v346 = vpop.trf.xlu0
      %v347 = vpop.trf.xlu0
      %v348 = vpop.trf.xlu0
      %v349 = vpop.trf.xlu0
      %v350 = vpop.trf.xlu0
      %v351 = vpop.trf.xlu0
      %v352 = vpop.trf.xlu0
      %v353 = vpop.trf.xlu0
      %v354 = vpop.trf.xlu0
      %v355 = vpop.trf.xlu0
      %v356 = vpop.trf.xlu0
      %v357 = vpop.trf.xlu0
      %v358 = vpop.trf.xlu0
      %v359 = vpop.trf.xlu0
      %v360 = vpop.trf.xlu0
      %v361 = vpop.trf.xlu0
      %362 = vset.pattern.permute.xlu0 97
      %363 = vperm.xlu0 %362, %v305
      %v364 = vpop.permute.xlu0 %363
      %366 = vset.pattern.permute.xlu0 97
      %367 = vperm.xlu0 %366, %v310
      %v368 = vpop.permute.xlu0 %367
      %v370 = vlaneseq
      %v371 = vshrl.u32 %v370, 7
      %v372 = vsub.s32 0, %v371
      %v373 = vrot.slane %v346, %v372
      %v374 = vadd.f32 %v364, %v373
      %v375 = vadd.f32 %v368, %v373
      %v376 = vmul.f32 %v374, 0.2
      %v377 = vmul.f32 %v375, 0.2
      %v378 = vmax.f32 %v374, %v376
      %v379 = vmax.f32 %v375, %v377
      %v380 = vsub.f32 %v217, 1.0
      %v381 = vsub.f32 %v218, 1.0
      %v382 = vmul.f32 %v380, 1e+30
      %v383 = vmul.f32 %v381, 1e+30
      %v384 = vadd.f32 %v378, %v382
      %v385 = vadd.f32 %v379, %v383
      %vm386 = vcmask 97280
      %v387 = vsel %vm386, %v384, -inf
      %388 = vmax.xlane.f32.xlu0 %v387
      %v389 = vpop.xlane.xlu0 %388
      %vm390 = vcmask 93184
      %v391 = vsel %vm390, %v385, -inf
      %392 = vmax.xlane.f32.xlu0 %v391
      %v393 = vpop.xlane.xlu0 %392
      %v394 = vsub.f32 %v384, %v389
      %v395 = vsub.f32 %v385, %v393
      %v396 = vmul.f32 %v394, 1.442695
      %v397 = vpow.pop %v396
      %v398 = vmul.f32 %v395, 1.442695
      %v399 = vpow.pop %v398
      %v400 = vmul.f32 %v397, %v217
      %v401 = vmul.f32 %v399, %v218
      %v402 = vsel %vm386, %v400, 0.0
      %403 = vadd.xlane.f32.xlu0 %v402
      %v404 = vpop.xlane.xlu0 %403
      %v405 = vsel %vm390, %v401, 0.0
      %406 = vadd.xlane.f32.xlu0 %v405
      %v407 = vpop.xlane.xlu0 %406
      %v408 = vmax.f32 %v404, 1e-30
      %v409 = vmax.f32 %v407, 1e-30
      %v410 = vrcp.pop %v408
      %v411 = vmul.f32 %v400, %v410
      %v412 = vrcp.pop %v409
      %v413 = vmul.f32 %v401, %v412
      %v414 = vlaneseq
      %v415 = vshrl.u32 %v414, 7
      %v416 = vsub.s32 0, %v415
      %v417 = vrot.slane %v222, %v416
      %v419 = vsel %vm386, %v411, 0
      %v422 = vsel %vm386, %v413, 0
      %vm424 = vcmask 1043456
      %v425 = vsel %vm424, %v310, 0
      %427 = vmatprep.subr.mxu0 0.0
      %428 = vmatpush1.msra.mxu0 0.0
      %429 = vmatprep.subr.mxu0 0.0
      %430 = vmatpush1.msra.mxu0 0.0
      %431 = vmatprep.subr.mxu0 0.0
      %432 = vmatpush1.msra.mxu0 0.0
      %433 = vmatprep.subr.mxu0 0.0
      %434 = vmatpush1.msra.mxu0 0.0
      %435 = vmatprep.subr.mxu0 0.0
      %436 = vmatpush1.msra.mxu0 0.0
      %437 = vmatprep.subr.mxu0 0.0
      %438 = vmatpush1.msra.mxu0 0.0
      %439 = vmatprep.subr.mxu0 0.0
      %440 = vmatpush1.msra.mxu0 0.0
      %441 = vmatprep.subr.mxu0 0.0
      %442 = vmatpush1.msra.mxu0 0.0
      %443 = vmatprep.subr.mxu0 0.0
      %444 = vmatpush1.msra.mxu0 0.0
      %445 = vmatprep.subr.mxu0 0.0
      %446 = vmatpush1.msra.mxu0 0.0
      %447 = vmatprep.subr.mxu0 0.0
      %448 = vmatpush1.msra.mxu0 0.0
      %449 = vmatprep.subr.mxu0 0.0
      %450 = vmatpush1.msra.mxu0 0.0
      %451 = vmatprep.subr.mxu0 0.0
      %452 = vmatpush1.msra.mxu0 0.0
      %453 = vmatprep.subr.mxu0 0.0
      %454 = vmatpush1.msra.mxu0 0.0
      %455 = vmatprep.subr.mxu0 0.0
      %456 = vmatpush1.msra.mxu0 %v425
      %457 = vmatprep.subr.mxu0 0.0
      %458 = vmatpush1.msra.mxu0 %v305
      %459 = vmatprep.subr.mxu0 0.0
      %460 = vmatpush2.msra.mxu0 0.0
      %461 = vmatprep.subr.mxu0 0.0
      %462 = vmatpush2.msra.mxu0 0.0
      %463 = vmatprep.subr.mxu0 0.0
      %464 = vmatpush2.msra.mxu0 0.0
      %465 = vmatprep.subr.mxu0 0.0
      %466 = vmatpush2.msra.mxu0 0.0
      %467 = vmatprep.subr.mxu0 0.0
      %468 = vmatpush2.msra.mxu0 0.0
      %469 = vmatprep.subr.mxu0 0.0
      %470 = vmatpush2.msra.mxu0 0.0
      %471 = vmatprep.subr.mxu0 0.0
      %472 = vmatpush2.msra.mxu0 0.0
      %473 = vmatprep.subr.mxu0 0.0
      %474 = vmatpush2.msra.mxu0 0.0
      %475 = vmatprep.subr.mxu0 0.0
      %476 = vmatpush2.msra.mxu0 0.0
      %477 = vmatprep.subr.mxu0 0.0
      %478 = vmatpush2.msra.mxu0 0.0
      %479 = vmatprep.subr.mxu0 0.0
      %480 = vmatpush2.msra.mxu0 0.0
      %481 = vmatprep.subr.mxu0 0.0
      %482 = vmatpush2.msra.mxu0 0.0
      %483 = vmatprep.subr.mxu0 0.0
      %484 = vmatpush2.msra.mxu0 0.0
      %485 = vmatprep.subr.mxu0 0.0
      %486 = vmatpush2.msra.mxu0 0.0
      %487 = vmatprep.subr.mxu0 0.0
      %488 = vmatpush2.msra.mxu0 0.0
      %489 = vmatprep.subr.mxu0 0.0
      %490 = vmatpush2.msra.mxu0 0.0
      %491 = vmatprep.mubr.f32.mxu0 0.0
      %492 = vmatmul.mubr.f32.gmra.mxu0 %v419
      %v493 = vpop.f32.mrf.mxu0
      %v494 = vadd.f32 %v417, %v493
      %v495 = vpop.f32.mrf.mxu0
      %496 = vmatprep.mubr.f32.mxu0 0.0
      %497 = vmatmul.mubr.f32.gmra.mxu0 %v422
      %v498 = vpop.f32.mrf.mxu0
      %v499 = vadd.f32 %v417, %v498
      %v500 = vpop.f32.mrf.mxu0
      %501 = vdwg.mxu0
      %502 = vset.pattern.permute.xlu0 99
      %503 = vperm.xlu0 %502, %v310
      %v504 = vpop.permute.xlu0 %503
      %506 = vset.pattern.permute.xlu0 99
      %507 = vperm.xlu0 %506, %v315
      %v508 = vpop.permute.xlu0 %507
      %v510 = vlaneseq
      %v511 = vshrl.u32 %v510, 7
      %v512 = vsub.s32 2, %v511
      %v513 = vrot.slane %v346, %v512
      %v514 = vadd.f32 %v504, %v513
      %v515 = vadd.f32 %v508, %v513
      %v516 = vmul.f32 %v514, 0.2
      %v517 = vmul.f32 %v515, 0.2
      %v518 = vmax.f32 %v514, %v516
      %v519 = vmax.f32 %v515, %v517
      %v520 = vsub.f32 %v219, 1.0
      %v521 = vmul.f32 %v520, 1e+30
      %v522 = vadd.f32 %v518, %v383
      %v523 = vadd.f32 %v519, %v521
      %vm524 = vcmask 97284
      %v525 = vsel %vm524, %v522, -inf
      %526 = vmax.xlane.f32.xlu0 %v525
      %v527 = vpop.xlane.xlu0 %526
      %vm528 = vcmask 95232
      %v529 = vsel %vm528, %v523, -inf
      %530 = vmax.xlane.f32.xlu0 %v529
      %v531 = vpop.xlane.xlu0 %530
      %v532 = vsub.f32 %v522, %v527
      %v533 = vsub.f32 %v523, %v531
      %v534 = vmul.f32 %v532, 1.442695
      %v535 = vpow.pop %v534
      %v536 = vmul.f32 %v533, 1.442695
      %v537 = vpow.pop %v536
      %v538 = vmul.f32 %v535, %v218
      %v539 = vmul.f32 %v537, %v219
      %v540 = vsel %vm524, %v538, 0.0
      %541 = vadd.xlane.f32.xlu0 %v540
      %v542 = vpop.xlane.xlu0 %541
      %v543 = vsel %vm528, %v539, 0.0
      %544 = vadd.xlane.f32.xlu0 %v543
      %v545 = vpop.xlane.xlu0 %544
      %v546 = vmax.f32 %v542, 1e-30
      %v547 = vmax.f32 %v545, 1e-30
      %v548 = vrcp.pop %v546
      %v549 = vmul.f32 %v538, %v548
      %v550 = vrcp.pop %v547
      %v551 = vmul.f32 %v539, %v550
      %v554 = vrot.slane %v549, 4
      %v555 = vrot.slane %v551, 4
      %v556 = vsel %vm424, %v554, %v555
      %557 = vrot.lane.b32.xlu0 %v305, 96
      %v558 = vpop.permute.xlu0 %557
      %559 = vrot.lane.b32.xlu0 %v310, 96
      %v560 = vpop.permute.xlu0 %559
      %563 = vrot.lane.b32.xlu0 %v417, 96
      %v564 = vpop.permute.xlu0 %563
      %v566 = vsel %vm386, %v556, 0
      %v568 = vsel %vm386, %v555, 0
      %v570 = vsel %vm424, %v560, 0
      %572 = vmatprep.subr.mxu0 0.0
      %573 = vmatpush1.msra.mxu0 0.0
      %574 = vmatprep.subr.mxu0 0.0
      %575 = vmatpush1.msra.mxu0 0.0
      %576 = vmatprep.subr.mxu0 0.0
      %577 = vmatpush1.msra.mxu0 0.0
      %578 = vmatprep.subr.mxu0 0.0
      %579 = vmatpush1.msra.mxu0 0.0
      %580 = vmatprep.subr.mxu0 0.0
      %581 = vmatpush1.msra.mxu0 0.0
      %582 = vmatprep.subr.mxu0 0.0
      %583 = vmatpush1.msra.mxu0 0.0
      %584 = vmatprep.subr.mxu0 0.0
      %585 = vmatpush1.msra.mxu0 0.0
      %586 = vmatprep.subr.mxu0 0.0
      %587 = vmatpush1.msra.mxu0 0.0
      %588 = vmatprep.subr.mxu0 0.0
      %589 = vmatpush1.msra.mxu0 0.0
      %590 = vmatprep.subr.mxu0 0.0
      %591 = vmatpush1.msra.mxu0 0.0
      %592 = vmatprep.subr.mxu0 0.0
      %593 = vmatpush1.msra.mxu0 0.0
      %594 = vmatprep.subr.mxu0 0.0
      %595 = vmatpush1.msra.mxu0 0.0
      %596 = vmatprep.subr.mxu0 0.0
      %597 = vmatpush1.msra.mxu0 0.0
      %598 = vmatprep.subr.mxu0 0.0
      %599 = vmatpush1.msra.mxu0 0.0
      %600 = vmatprep.subr.mxu0 0.0
      %601 = vmatpush1.msra.mxu0 %v570
      %602 = vmatprep.subr.mxu0 0.0
      %603 = vmatpush1.msra.mxu0 %v558
      %604 = vmatprep.subr.mxu0 0.0
      %605 = vmatpush2.msra.mxu0 0.0
      %606 = vmatprep.subr.mxu0 0.0
      %607 = vmatpush2.msra.mxu0 0.0
      %608 = vmatprep.subr.mxu0 0.0
      %609 = vmatpush2.msra.mxu0 0.0
      %610 = vmatprep.subr.mxu0 0.0
      %611 = vmatpush2.msra.mxu0 0.0
      %612 = vmatprep.subr.mxu0 0.0
      %613 = vmatpush2.msra.mxu0 0.0
      %614 = vmatprep.subr.mxu0 0.0
      %615 = vmatpush2.msra.mxu0 0.0
      %616 = vmatprep.subr.mxu0 0.0
      %617 = vmatpush2.msra.mxu0 0.0
      %618 = vmatprep.subr.mxu0 0.0
      %619 = vmatpush2.msra.mxu0 0.0
      %620 = vmatprep.subr.mxu0 0.0
      %621 = vmatpush2.msra.mxu0 0.0
      %622 = vmatprep.subr.mxu0 0.0
      %623 = vmatpush2.msra.mxu0 0.0
      %624 = vmatprep.subr.mxu0 0.0
      %625 = vmatpush2.msra.mxu0 0.0
      %626 = vmatprep.subr.mxu0 0.0
      %627 = vmatpush2.msra.mxu0 0.0
      %628 = vmatprep.subr.mxu0 0.0
      %629 = vmatpush2.msra.mxu0 0.0
      %630 = vmatprep.subr.mxu0 0.0
      %631 = vmatpush2.msra.mxu0 0.0
      %632 = vmatprep.subr.mxu0 0.0
      %633 = vmatpush2.msra.mxu0 0.0
      %634 = vmatprep.subr.mxu0 0.0
      %635 = vmatpush2.msra.mxu0 0.0
      %636 = vmatprep.mubr.f32.mxu0 0.0
      %637 = vmatmul.mubr.f32.gmra.mxu0 %v566
      %v638 = vpop.f32.mrf.mxu0
      %v639 = vadd.f32 %v564, %v638
      %v640 = vpop.f32.mrf.mxu0
      %641 = vmatprep.mubr.f32.mxu0 0.0
      %642 = vmatmul.mubr.f32.gmra.mxu0 %v568
      %v643 = vpop.f32.mrf.mxu0
      %v644 = vadd.f32 %v564, %v643
      %v645 = vpop.f32.mrf.mxu0
      %646 = vdwg.mxu0
      %647 = vset.pattern.permute.xlu0 101
      %648 = vperm.xlu0 %647, %v305
      %v649 = vpop.permute.xlu0 %648
      %651 = vset.pattern.permute.xlu0 101
      %652 = vperm.xlu0 %651, %v310
      %v653 = vpop.permute.xlu0 %652
      %v655 = vlaneseq
      %v656 = vshrl.u32 %v655, 7
      %v657 = vsub.s32 4, %v656
      %v658 = vrot.slane %v346, %v657
      %v659 = vadd.f32 %v649, %v658
      %v660 = vadd.f32 %v653, %v658
      %v661 = vmul.f32 %v659, 0.2
      %v662 = vmul.f32 %v660, 0.2
      %v663 = vmax.f32 %v659, %v661
      %v664 = vmax.f32 %v660, %v662
      %v665 = vadd.f32 %v663, %v382
      %v666 = vadd.f32 %v664, %v383
      %vm667 = vcmask 179296
      %v668 = vsel %vm667, %v665, -inf
      %669 = vmax.xlane.f32.xlu0 %v668
      %v670 = vpop.xlane.xlu0 %669
      %vm671 = vcmask 175200
      %v672 = vsel %vm671, %v666, -inf
      %673 = vmax.xlane.f32.xlu0 %v672
      %v674 = vpop.xlane.xlu0 %673
      %v675 = vsub.f32 %v665, %v670
      %v676 = vsub.f32 %v666, %v674
      %v677 = vmul.f32 %v675, 1.442695
      %v678 = vpow.pop %v677
      %v679 = vmul.f32 %v676, 1.442695
      %v680 = vpow.pop %v679
      %v681 = vmul.f32 %v678, %v217
      %v682 = vmul.f32 %v680, %v218
      %685 = vrot.lane.b32.xlu0 %v681, 116
      %v686 = vpop.permute.xlu0 %685
      %687 = vrot.lane.b32.xlu0 %v682, 116
      %v688 = vpop.permute.xlu0 %687
      %vm691 = vcmask 80896
      %v692 = vsel %vm691, %v686, 0.0
      %693 = vadd.xlane.f32.xlu0 %v692
      %v694 = vpop.xlane.xlu0 %693
      %vm695 = vcmask 76800
      %v696 = vsel %vm695, %v688, 0.0
      %697 = vadd.xlane.f32.xlu0 %v696
      %v698 = vpop.xlane.xlu0 %697
      %v699 = vmax.f32 %v694, 1e-30
      %v700 = vmax.f32 %v698, 1e-30
      %v701 = vrcp.pop %v699
      %v702 = vmul.f32 %v681, %v701
      %v703 = vrcp.pop %v700
      %v704 = vmul.f32 %v682, %v703
      %707 = vrot.lane.b32.xlu0 %v702, 116
      %v708 = vpop.permute.xlu0 %707
      %709 = vrot.lane.b32.xlu0 %v704, 116
      %v710 = vpop.permute.xlu0 %709
      %v711 = vrot.slane %v310, 4
      %v712 = vrot.slane %v315, 4
      %v713 = vsel %vm424, %v711, %v712
      %714 = vrot.lane.b32.xlu0 %v713, 64
      %v715 = vpop.permute.xlu0 %714
      %716 = vrot.lane.b32.xlu0 %v712, 64
      %v717 = vpop.permute.xlu0 %716
      %719 = vrot.lane.b32.xlu0 %v417, 64
      %v720 = vpop.permute.xlu0 %719
      %v722 = vsel %vm691, %v708, 0
      %v724 = vsel %vm691, %v710, 0
      %vm726 = vcmask 1041408
      %v727 = vsel %vm726, %v717, 0
      %729 = vmatprep.subr.mxu0 0.0
      %730 = vmatpush1.msra.mxu0 0.0
      %731 = vmatprep.subr.mxu0 0.0
      %732 = vmatpush1.msra.mxu0 0.0
      %733 = vmatprep.subr.mxu0 0.0
      %734 = vmatpush1.msra.mxu0 0.0
      %735 = vmatprep.subr.mxu0 0.0
      %736 = vmatpush1.msra.mxu0 0.0
      %737 = vmatprep.subr.mxu0 0.0
      %738 = vmatpush1.msra.mxu0 0.0
      %739 = vmatprep.subr.mxu0 0.0
      %740 = vmatpush1.msra.mxu0 0.0
      %741 = vmatprep.subr.mxu0 0.0
      %742 = vmatpush1.msra.mxu0 0.0
      %743 = vmatprep.subr.mxu0 0.0
      %744 = vmatpush1.msra.mxu0 0.0
      %745 = vmatprep.subr.mxu0 0.0
      %746 = vmatpush1.msra.mxu0 0.0
      %747 = vmatprep.subr.mxu0 0.0
      %748 = vmatpush1.msra.mxu0 0.0
      %749 = vmatprep.subr.mxu0 0.0
      %750 = vmatpush1.msra.mxu0 0.0
      %751 = vmatprep.subr.mxu0 0.0
      %752 = vmatpush1.msra.mxu0 0.0
      %753 = vmatprep.subr.mxu0 0.0
      %754 = vmatpush1.msra.mxu0 0.0
      %755 = vmatprep.subr.mxu0 0.0
      %756 = vmatpush1.msra.mxu0 0.0
      %757 = vmatprep.subr.mxu0 0.0
      %758 = vmatpush1.msra.mxu0 %v727
      %759 = vmatprep.subr.mxu0 0.0
      %760 = vmatpush1.msra.mxu0 %v715
      %761 = vmatprep.subr.mxu0 0.0
      %762 = vmatpush2.msra.mxu0 0.0
      %763 = vmatprep.subr.mxu0 0.0
      %764 = vmatpush2.msra.mxu0 0.0
      %765 = vmatprep.subr.mxu0 0.0
      %766 = vmatpush2.msra.mxu0 0.0
      %767 = vmatprep.subr.mxu0 0.0
      %768 = vmatpush2.msra.mxu0 0.0
      %769 = vmatprep.subr.mxu0 0.0
      %770 = vmatpush2.msra.mxu0 0.0
      %771 = vmatprep.subr.mxu0 0.0
      %772 = vmatpush2.msra.mxu0 0.0
      %773 = vmatprep.subr.mxu0 0.0
      %774 = vmatpush2.msra.mxu0 0.0
      %775 = vmatprep.subr.mxu0 0.0
      %776 = vmatpush2.msra.mxu0 0.0
      %777 = vmatprep.subr.mxu0 0.0
      %778 = vmatpush2.msra.mxu0 0.0
      %779 = vmatprep.subr.mxu0 0.0
      %780 = vmatpush2.msra.mxu0 0.0
      %781 = vmatprep.subr.mxu0 0.0
      %782 = vmatpush2.msra.mxu0 0.0
      %783 = vmatprep.subr.mxu0 0.0
      %784 = vmatpush2.msra.mxu0 0.0
      %785 = vmatprep.subr.mxu0 0.0
      %786 = vmatpush2.msra.mxu0 0.0
      %787 = vmatprep.subr.mxu0 0.0
      %788 = vmatpush2.msra.mxu0 0.0
      %789 = vmatprep.subr.mxu0 0.0
      %790 = vmatpush2.msra.mxu0 0.0
      %791 = vmatprep.subr.mxu0 0.0
      %792 = vmatpush2.msra.mxu0 0.0
      %793 = vmatprep.mubr.f32.mxu0 0.0
      %794 = vmatmul.mubr.f32.gmra.mxu0 %v722
      %v795 = vpop.f32.mrf.mxu0
      %v796 = vadd.f32 %v720, %v795
      %v797 = vpop.f32.mrf.mxu0
      %798 = vmatprep.mubr.f32.mxu0 0.0
      %799 = vmatmul.mubr.f32.gmra.mxu0 %v724
      %v800 = vpop.f32.mrf.mxu0
      %v801 = vadd.f32 %v720, %v800
      %v802 = vpop.f32.mrf.mxu0
      %803 = vdwg.mxu0
      %v804 = vadd.f32 %v494, %v796
      %v805 = vadd.f32 %v499, %v801
      %vm806 = vcmp.gt.f32.partialorder %v804, 0.0
      %vm807 = vcmp.gt.f32.partialorder %v805, 0.0
      %v808 = vmin.f32 %v804, 0.0
      %v809 = vmin.f32 %v805, 0.0
      %v810 = vmul.f32 %v808, 1.442695
      %v811 = vpow.pop %v810
      %v812 = vmul.f32 %v809, 1.442695
      %v813 = vpow.pop %v812
      %v814 = vsub.f32 %v811, 1.0
      %v815 = vsub.f32 %v813, 1.0
      %v816 = vsel %vm806, %v804, %v814
      %v817 = vsel %vm807, %v805, %v815
      %vm818 = vcmp.gt.f32.partialorder %v639, 0.0
      %vm819 = vcmp.gt.f32.partialorder %v644, 0.0
      %v820 = vmin.f32 %v639, 0.0
      %v821 = vmin.f32 %v644, 0.0
      %v822 = vmul.f32 %v820, 1.442695
      %v823 = vpow.pop %v822
      %v824 = vmul.f32 %v821, 1.442695
      %v825 = vpow.pop %v824
      %v826 = vsub.f32 %v823, 1.0
      %v827 = vsub.f32 %v825, 1.0
      %v828 = vsel %vm818, %v639, %v826
      %v829 = vsel %vm819, %v644, %v827
      %v832 = vrot.slane %v828, 4
      %v833 = vrot.slane %v829, 4
      %v834 = vsel %vm424, %v832, %v833
      %v836 = vsel %vm424, %v817, %v832
      %vm837 = vcmask 261120
      %v839 = vsel %vm837, %v816, 0
      %v842 = vsel %vm837, %v836, 0
      %v844 = vsel %vm837, %v834, 0
      %846 = vmatprep.subr.mxu0 0.0
      %847 = vmatpush1.msra.mxu0 0.0
      %848 = vmatprep.subr.mxu0 0.0
      %849 = vmatpush1.msra.mxu0 0.0
      %850 = vmatprep.subr.mxu0 0.0
      %851 = vmatpush1.msra.mxu0 0.0
      %852 = vmatprep.subr.mxu0 0.0
      %853 = vmatpush1.msra.mxu0 0.0
      %854 = vmatprep.subr.mxu0 0.0
      %855 = vmatpush1.msra.mxu0 0.0
      %856 = vmatprep.subr.mxu0 0.0
      %857 = vmatpush1.msra.mxu0 0.0
      %858 = vmatprep.subr.mxu0 0.0
      %859 = vmatpush1.msra.mxu0 0.0
      %860 = vmatprep.subr.mxu0 0.0
      %861 = vmatpush1.msra.mxu0 0.0
      %862 = vmatprep.subr.mxu0 0.0
      %863 = vmatpush1.msra.mxu0 0.0
      %864 = vmatprep.subr.mxu0 0.0
      %865 = vmatpush1.msra.mxu0 0.0
      %866 = vmatprep.subr.mxu0 0.0
      %867 = vmatpush1.msra.mxu0 0.0
      %868 = vmatprep.subr.mxu0 0.0
      %869 = vmatpush1.msra.mxu0 0.0
      %870 = vmatprep.subr.mxu0 0.0
      %871 = vmatpush1.msra.mxu0 %v226
      %872 = vmatprep.subr.mxu0 0.0
      %873 = vmatpush1.msra.mxu0 %v225
      %874 = vmatprep.subr.mxu0 0.0
      %875 = vmatpush1.msra.mxu0 %v224
      %876 = vmatprep.subr.mxu0 0.0
      %877 = vmatpush1.msra.mxu0 %v223
      %878 = vmatprep.subr.mxu0 0.0
      %879 = vmatpush2.msra.mxu0 0.0
      %880 = vmatprep.subr.mxu0 0.0
      %881 = vmatpush2.msra.mxu0 0.0
      %882 = vmatprep.subr.mxu0 0.0
      %883 = vmatpush2.msra.mxu0 0.0
      %884 = vmatprep.subr.mxu0 0.0
      %885 = vmatpush2.msra.mxu0 0.0
      %886 = vmatprep.subr.mxu0 0.0
      %887 = vmatpush2.msra.mxu0 0.0
      %888 = vmatprep.subr.mxu0 0.0
      %889 = vmatpush2.msra.mxu0 0.0
      %890 = vmatprep.subr.mxu0 0.0
      %891 = vmatpush2.msra.mxu0 0.0
      %892 = vmatprep.subr.mxu0 0.0
      %893 = vmatpush2.msra.mxu0 0.0
      %894 = vmatprep.subr.mxu0 0.0
      %895 = vmatpush2.msra.mxu0 0.0
      %896 = vmatprep.subr.mxu0 0.0
      %897 = vmatpush2.msra.mxu0 0.0
      %898 = vmatprep.subr.mxu0 0.0
      %899 = vmatpush2.msra.mxu0 0.0
      %900 = vmatprep.subr.mxu0 0.0
      %901 = vmatpush2.msra.mxu0 0.0
      %902 = vmatprep.subr.mxu0 0.0
      %903 = vmatpush2.msra.mxu0 0.0
      %904 = vmatprep.subr.mxu0 0.0
      %905 = vmatpush2.msra.mxu0 0.0
      %906 = vmatprep.subr.mxu0 0.0
      %907 = vmatpush2.msra.mxu0 0.0
      %908 = vmatprep.subr.mxu0 0.0
      %909 = vmatpush2.msra.mxu0 0.0
      %910 = vmatprep.mubr.f32.mxu0 0.0
      %911 = vmatmul.mubr.f32.gmra.mxu0 %v839
      %v912 = vpop.f32.mrf.mxu0
      %v913 = vadd.f32 0.0, %v912
      %v914 = vpop.f32.mrf.mxu0
      %915 = vmatprep.mubr.f32.mxu0 0.0
      %916 = vmatmul.mubr.f32.gmra.mxu0 %v842
      %v917 = vpop.f32.mrf.mxu0
      %v918 = vadd.f32 0.0, %v917
      %v919 = vpop.f32.mrf.mxu0
      %920 = vmatprep.mubr.f32.mxu0 0.0
      %921 = vmatmul.mubr.f32.gmra.mxu0 %v844
      %v922 = vpop.f32.mrf.mxu0
      %v923 = vadd.f32 0.0, %v922
      %v924 = vpop.f32.mrf.mxu0
      %925 = vdwg.mxu0
      %929 = vrot.lane.b32.xlu0 %v913, 32
      %v930 = vpop.permute.xlu0 %929
      %931 = vrot.lane.b32.xlu0 %v918, 32
      %v932 = vpop.permute.xlu0 %931
      %933 = vrot.lane.b32.xlu0 %v923, 32
      %v934 = vpop.permute.xlu0 %933
      %938 = vxpose.xlu0.b32.start [1/16] %v930, 128
      %939 = vxpose.xlu0.b32.cont [2/16] %v932, 128
      %940 = vxpose.xlu0.b32.cont [3/16] %v934, 128
      %941 = vxpose.xlu0.b32.cont [4/16] 0.0, 128
      %942 = vxpose.xlu0.b32.cont [5/16] 0.0, 128
      %943 = vxpose.xlu0.b32.cont [6/16] 0.0, 128
      %944 = vxpose.xlu0.b32.cont [7/16] 0.0, 128
      %945 = vxpose.xlu0.b32.cont [8/16] 0.0, 128
      %946 = vxpose.xlu0.b32.cont [9/16] 0.0, 128
      %947 = vxpose.xlu0.b32.cont [10/16] 0.0, 128
      %948 = vxpose.xlu0.b32.cont [11/16] 0.0, 128
      %949 = vxpose.xlu0.b32.cont [12/16] 0.0, 128
      %950 = vxpose.xlu0.b32.cont [13/16] 0.0, 128
      %951 = vxpose.xlu0.b32.cont [14/16] 0.0, 128
      %952 = vxpose.xlu0.b32.cont [15/16] 0.0, 128
      %953 = vxpose.xlu0.b32.end [16/16] 0.0, 128
      %v954 = vpop.trf.xlu0
      %v955 = vpop.trf.xlu0
      %v956 = vpop.trf.xlu0
      %v957 = vpop.trf.xlu0
      %v958 = vpop.trf.xlu0
      %v959 = vpop.trf.xlu0
      %v960 = vpop.trf.xlu0
      %v961 = vpop.trf.xlu0
      %v962 = vpop.trf.xlu0
      %v963 = vpop.trf.xlu0
      %v964 = vpop.trf.xlu0
      %v965 = vpop.trf.xlu0
      %v966 = vpop.trf.xlu0
      %v967 = vpop.trf.xlu0
      %v968 = vpop.trf.xlu0
      %v969 = vpop.trf.xlu0
      %970 = vset.pattern.permute.xlu0 97
      %971 = vperm.xlu0 %970, %v913
      %v972 = vpop.permute.xlu0 %971
      %974 = vset.pattern.permute.xlu0 97
      %975 = vperm.xlu0 %974, %v918
      %v976 = vpop.permute.xlu0 %975
      %v978 = vlaneseq
      %v979 = vshrl.u32 %v978, 7
      %v980 = vsub.s32 0, %v979
      %v981 = vrot.slane %v954, %v980
      %v982 = vadd.f32 %v972, %v981
      %v983 = vadd.f32 %v976, %v981
      %v984 = vmul.f32 %v982, 0.2
      %v985 = vmul.f32 %v983, 0.2
      %v986 = vmax.f32 %v982, %v984
      %v987 = vmax.f32 %v983, %v985
      %v988 = vadd.f32 %v986, %v382
      %v989 = vadd.f32 %v987, %v383
      %v990 = vsel %vm386, %v988, -inf
      %991 = vmax.xlane.f32.xlu0 %v990
      %v992 = vpop.xlane.xlu0 %991
      %v993 = vsel %vm390, %v989, -inf
      %994 = vmax.xlane.f32.xlu0 %v993
      %v995 = vpop.xlane.xlu0 %994
      %v996 = vsub.f32 %v988, %v992
      %v997 = vsub.f32 %v989, %v995
      %v998 = vmul.f32 %v996, 1.442695
      %v999 = vpow.pop %v998
      %v1000 = vmul.f32 %v997, 1.442695
      %v1001 = vpow.pop %v1000
      %v1002 = vmul.f32 %v999, %v217
      %v1003 = vmul.f32 %v1001, %v218
      %v1004 = vsel %vm386, %v1002, 0.0
      %1005 = vadd.xlane.f32.xlu0 %v1004
      %v1006 = vpop.xlane.xlu0 %1005
      %v1007 = vsel %vm390, %v1003, 0.0
      %1008 = vadd.xlane.f32.xlu0 %v1007
      %v1009 = vpop.xlane.xlu0 %1008
      %v1010 = vmax.f32 %v1006, 1e-30
      %v1011 = vmax.f32 %v1009, 1e-30
      %v1012 = vrcp.pop %v1010
      %v1013 = vmul.f32 %v1002, %v1012
      %v1014 = vrcp.pop %v1011
      %v1015 = vmul.f32 %v1003, %v1014
      %v1016 = vlaneseq
      %v1017 = vshrl.u32 %v1016, 7
      %v1018 = vsub.s32 0, %v1017
      %v1019 = vrot.slane %v227, %v1018
      %v1021 = vsel %vm386, %v1013, 0
      %v1024 = vsel %vm386, %v1015, 0
      %v1026 = vsel %vm424, %v918, 0
      %1028 = vmatprep.subr.mxu0 0.0
      %1029 = vmatpush1.msra.mxu0 0.0
      %1030 = vmatprep.subr.mxu0 0.0
      %1031 = vmatpush1.msra.mxu0 0.0
      %1032 = vmatprep.subr.mxu0 0.0
      %1033 = vmatpush1.msra.mxu0 0.0
      %1034 = vmatprep.subr.mxu0 0.0
      %1035 = vmatpush1.msra.mxu0 0.0
      %1036 = vmatprep.subr.mxu0 0.0
      %1037 = vmatpush1.msra.mxu0 0.0
      %1038 = vmatprep.subr.mxu0 0.0
      %1039 = vmatpush1.msra.mxu0 0.0
      %1040 = vmatprep.subr.mxu0 0.0
      %1041 = vmatpush1.msra.mxu0 0.0
      %1042 = vmatprep.subr.mxu0 0.0
      %1043 = vmatpush1.msra.mxu0 0.0
      %1044 = vmatprep.subr.mxu0 0.0
      %1045 = vmatpush1.msra.mxu0 0.0
      %1046 = vmatprep.subr.mxu0 0.0
      %1047 = vmatpush1.msra.mxu0 0.0
      %1048 = vmatprep.subr.mxu0 0.0
      %1049 = vmatpush1.msra.mxu0 0.0
      %1050 = vmatprep.subr.mxu0 0.0
      %1051 = vmatpush1.msra.mxu0 0.0
      %1052 = vmatprep.subr.mxu0 0.0
      %1053 = vmatpush1.msra.mxu0 0.0
      %1054 = vmatprep.subr.mxu0 0.0
      %1055 = vmatpush1.msra.mxu0 0.0
      %1056 = vmatprep.subr.mxu0 0.0
      %1057 = vmatpush1.msra.mxu0 %v1026
      %1058 = vmatprep.subr.mxu0 0.0
      %1059 = vmatpush1.msra.mxu0 %v913
      %1060 = vmatprep.subr.mxu0 0.0
      %1061 = vmatpush2.msra.mxu0 0.0
      %1062 = vmatprep.subr.mxu0 0.0
      %1063 = vmatpush2.msra.mxu0 0.0
      %1064 = vmatprep.subr.mxu0 0.0
      %1065 = vmatpush2.msra.mxu0 0.0
      %1066 = vmatprep.subr.mxu0 0.0
      %1067 = vmatpush2.msra.mxu0 0.0
      %1068 = vmatprep.subr.mxu0 0.0
      %1069 = vmatpush2.msra.mxu0 0.0
      %1070 = vmatprep.subr.mxu0 0.0
      %1071 = vmatpush2.msra.mxu0 0.0
      %1072 = vmatprep.subr.mxu0 0.0
      %1073 = vmatpush2.msra.mxu0 0.0
      %1074 = vmatprep.subr.mxu0 0.0
      %1075 = vmatpush2.msra.mxu0 0.0
      %1076 = vmatprep.subr.mxu0 0.0
      %1077 = vmatpush2.msra.mxu0 0.0
      %1078 = vmatprep.subr.mxu0 0.0
      %1079 = vmatpush2.msra.mxu0 0.0
      %1080 = vmatprep.subr.mxu0 0.0
      %1081 = vmatpush2.msra.mxu0 0.0
      %1082 = vmatprep.subr.mxu0 0.0
      %1083 = vmatpush2.msra.mxu0 0.0
      %1084 = vmatprep.subr.mxu0 0.0
      %1085 = vmatpush2.msra.mxu0 0.0
      %1086 = vmatprep.subr.mxu0 0.0
      %1087 = vmatpush2.msra.mxu0 0.0
      %1088 = vmatprep.subr.mxu0 0.0
      %1089 = vmatpush2.msra.mxu0 0.0
      %1090 = vmatprep.subr.mxu0 0.0
      %1091 = vmatpush2.msra.mxu0 0.0
      %1092 = vmatprep.mubr.f32.mxu0 0.0
      %1093 = vmatmul.mubr.f32.gmra.mxu0 %v1021
      %v1094 = vpop.f32.mrf.mxu0
      %v1095 = vadd.f32 %v1019, %v1094
      %v1096 = vpop.f32.mrf.mxu0
      %1097 = vmatprep.mubr.f32.mxu0 0.0
      %1098 = vmatmul.mubr.f32.gmra.mxu0 %v1024
      %v1099 = vpop.f32.mrf.mxu0
      %v1100 = vadd.f32 %v1019, %v1099
      %v1101 = vpop.f32.mrf.mxu0
      %1102 = vdwg.mxu0
      %1103 = vset.pattern.permute.xlu0 99
      %1104 = vperm.xlu0 %1103, %v918
      %v1105 = vpop.permute.xlu0 %1104
      %1107 = vset.pattern.permute.xlu0 99
      %1108 = vperm.xlu0 %1107, %v923
      %v1109 = vpop.permute.xlu0 %1108
      %v1111 = vlaneseq
      %v1112 = vshrl.u32 %v1111, 7
      %v1113 = vsub.s32 2, %v1112
      %v1114 = vrot.slane %v954, %v1113
      %v1115 = vadd.f32 %v1105, %v1114
      %v1116 = vadd.f32 %v1109, %v1114
      %v1117 = vmul.f32 %v1115, 0.2
      %v1118 = vmul.f32 %v1116, 0.2
      %v1119 = vmax.f32 %v1115, %v1117
      %v1120 = vmax.f32 %v1116, %v1118
      %v1121 = vadd.f32 %v1119, %v383
      %v1122 = vadd.f32 %v1120, %v521
      %v1123 = vsel %vm524, %v1121, -inf
      %1124 = vmax.xlane.f32.xlu0 %v1123
      %v1125 = vpop.xlane.xlu0 %1124
      %v1126 = vsel %vm528, %v1122, -inf
      %1127 = vmax.xlane.f32.xlu0 %v1126
      %v1128 = vpop.xlane.xlu0 %1127
      %v1129 = vsub.f32 %v1121, %v1125
      %v1130 = vsub.f32 %v1122, %v1128
      %v1131 = vmul.f32 %v1129, 1.442695
      %v1132 = vpow.pop %v1131
      %v1133 = vmul.f32 %v1130, 1.442695
      %v1134 = vpow.pop %v1133
      %v1135 = vmul.f32 %v1132, %v218
      %v1136 = vmul.f32 %v1134, %v219
      %v1137 = vsel %vm524, %v1135, 0.0
      %1138 = vadd.xlane.f32.xlu0 %v1137
      %v1139 = vpop.xlane.xlu0 %1138
      %v1140 = vsel %vm528, %v1136, 0.0
      %1141 = vadd.xlane.f32.xlu0 %v1140
      %v1142 = vpop.xlane.xlu0 %1141
      %v1143 = vmax.f32 %v1139, 1e-30
      %v1144 = vmax.f32 %v1142, 1e-30
      %v1145 = vrcp.pop %v1143
      %v1146 = vmul.f32 %v1135, %v1145
      %v1147 = vrcp.pop %v1144
      %v1148 = vmul.f32 %v1136, %v1147
      %v1151 = vrot.slane %v1146, 4
      %v1152 = vrot.slane %v1148, 4
      %v1153 = vsel %vm424, %v1151, %v1152
      %1154 = vrot.lane.b32.xlu0 %v913, 96
      %v1155 = vpop.permute.xlu0 %1154
      %1156 = vrot.lane.b32.xlu0 %v918, 96
      %v1157 = vpop.permute.xlu0 %1156
      %1160 = vrot.lane.b32.xlu0 %v1019, 96
      %v1161 = vpop.permute.xlu0 %1160
      %v1163 = vsel %vm386, %v1153, 0
      %v1165 = vsel %vm386, %v1152, 0
      %v1167 = vsel %vm424, %v1157, 0
      %1169 = vmatprep.subr.mxu0 0.0
      %1170 = vmatpush1.msra.mxu0 0.0
      %1171 = vmatprep.subr.mxu0 0.0
      %1172 = vmatpush1.msra.mxu0 0.0
      %1173 = vmatprep.subr.mxu0 0.0
      %1174 = vmatpush1.msra.mxu0 0.0
      %1175 = vmatprep.subr.mxu0 0.0
      %1176 = vmatpush1.msra.mxu0 0.0
      %1177 = vmatprep.subr.mxu0 0.0
      %1178 = vmatpush1.msra.mxu0 0.0
      %1179 = vmatprep.subr.mxu0 0.0
      %1180 = vmatpush1.msra.mxu0 0.0
      %1181 = vmatprep.subr.mxu0 0.0
      %1182 = vmatpush1.msra.mxu0 0.0
      %1183 = vmatprep.subr.mxu0 0.0
      %1184 = vmatpush1.msra.mxu0 0.0
      %1185 = vmatprep.subr.mxu0 0.0
      %1186 = vmatpush1.msra.mxu0 0.0
      %1187 = vmatprep.subr.mxu0 0.0
      %1188 = vmatpush1.msra.mxu0 0.0
      %1189 = vmatprep.subr.mxu0 0.0
      %1190 = vmatpush1.msra.mxu0 0.0
      %1191 = vmatprep.subr.mxu0 0.0
      %1192 = vmatpush1.msra.mxu0 0.0
      %1193 = vmatprep.subr.mxu0 0.0
      %1194 = vmatpush1.msra.mxu0 0.0
      %1195 = vmatprep.subr.mxu0 0.0
      %1196 = vmatpush1.msra.mxu0 0.0
      %1197 = vmatprep.subr.mxu0 0.0
      %1198 = vmatpush1.msra.mxu0 %v1167
      %1199 = vmatprep.subr.mxu0 0.0
      %1200 = vmatpush1.msra.mxu0 %v1155
      %1201 = vmatprep.subr.mxu0 0.0
      %1202 = vmatpush2.msra.mxu0 0.0
      %1203 = vmatprep.subr.mxu0 0.0
      %1204 = vmatpush2.msra.mxu0 0.0
      %1205 = vmatprep.subr.mxu0 0.0
      %1206 = vmatpush2.msra.mxu0 0.0
      %1207 = vmatprep.subr.mxu0 0.0
      %1208 = vmatpush2.msra.mxu0 0.0
      %1209 = vmatprep.subr.mxu0 0.0
      %1210 = vmatpush2.msra.mxu0 0.0
      %1211 = vmatprep.subr.mxu0 0.0
      %1212 = vmatpush2.msra.mxu0 0.0
      %1213 = vmatprep.subr.mxu0 0.0
      %1214 = vmatpush2.msra.mxu0 0.0
      %1215 = vmatprep.subr.mxu0 0.0
      %1216 = vmatpush2.msra.mxu0 0.0
      %1217 = vmatprep.subr.mxu0 0.0
      %1218 = vmatpush2.msra.mxu0 0.0
      %1219 = vmatprep.subr.mxu0 0.0
      %1220 = vmatpush2.msra.mxu0 0.0
      %1221 = vmatprep.subr.mxu0 0.0
      %1222 = vmatpush2.msra.mxu0 0.0
      %1223 = vmatprep.subr.mxu0 0.0
      %1224 = vmatpush2.msra.mxu0 0.0
      %1225 = vmatprep.subr.mxu0 0.0
      %1226 = vmatpush2.msra.mxu0 0.0
      %1227 = vmatprep.subr.mxu0 0.0
      %1228 = vmatpush2.msra.mxu0 0.0
      %1229 = vmatprep.subr.mxu0 0.0
      %1230 = vmatpush2.msra.mxu0 0.0
      %1231 = vmatprep.subr.mxu0 0.0
      %1232 = vmatpush2.msra.mxu0 0.0
      %1233 = vmatprep.mubr.f32.mxu0 0.0
      %1234 = vmatmul.mubr.f32.gmra.mxu0 %v1163
      %v1235 = vpop.f32.mrf.mxu0
      %v1236 = vadd.f32 %v1161, %v1235
      %v1237 = vpop.f32.mrf.mxu0
      %1238 = vmatprep.mubr.f32.mxu0 0.0
      %1239 = vmatmul.mubr.f32.gmra.mxu0 %v1165
      %v1240 = vpop.f32.mrf.mxu0
      %v1241 = vadd.f32 %v1161, %v1240
      %v1242 = vpop.f32.mrf.mxu0
      %1243 = vdwg.mxu0
      %1244 = vset.pattern.permute.xlu0 101
      %1245 = vperm.xlu0 %1244, %v913
      %v1246 = vpop.permute.xlu0 %1245
      %1248 = vset.pattern.permute.xlu0 101
      %1249 = vperm.xlu0 %1248, %v918
      %v1250 = vpop.permute.xlu0 %1249
      %v1252 = vlaneseq
      %v1253 = vshrl.u32 %v1252, 7
      %v1254 = vsub.s32 4, %v1253
      %v1255 = vrot.slane %v954, %v1254
      %v1256 = vadd.f32 %v1246, %v1255
      %v1257 = vadd.f32 %v1250, %v1255
      %v1258 = vmul.f32 %v1256, 0.2
      %v1259 = vmul.f32 %v1257, 0.2
      %v1260 = vmax.f32 %v1256, %v1258
      %v1261 = vmax.f32 %v1257, %v1259
      %v1262 = vadd.f32 %v1260, %v382
      %v1263 = vadd.f32 %v1261, %v383
      %v1264 = vsel %vm667, %v1262, -inf
      %1265 = vmax.xlane.f32.xlu0 %v1264
      %v1266 = vpop.xlane.xlu0 %1265
      %v1267 = vsel %vm671, %v1263, -inf
      %1268 = vmax.xlane.f32.xlu0 %v1267
      %v1269 = vpop.xlane.xlu0 %1268
      %v1270 = vsub.f32 %v1262, %v1266
      %v1271 = vsub.f32 %v1263, %v1269
      %v1272 = vmul.f32 %v1270, 1.442695
      %v1273 = vpow.pop %v1272
      %v1274 = vmul.f32 %v1271, 1.442695
      %v1275 = vpow.pop %v1274
      %v1276 = vmul.f32 %v1273, %v217
      %v1277 = vmul.f32 %v1275, %v218
      %1280 = vrot.lane.b32.xlu0 %v1276, 116
      %v1281 = vpop.permute.xlu0 %1280
      %1282 = vrot.lane.b32.xlu0 %v1277, 116
      %v1283 = vpop.permute.xlu0 %1282
      %v1286 = vsel %vm691, %v1281, 0.0
      %1287 = vadd.xlane.f32.xlu0 %v1286
      %v1288 = vpop.xlane.xlu0 %1287
      %v1289 = vsel %vm695, %v1283, 0.0
      %1290 = vadd.xlane.f32.xlu0 %v1289
      %v1291 = vpop.xlane.xlu0 %1290
      %v1292 = vmax.f32 %v1288, 1e-30
      %v1293 = vmax.f32 %v1291, 1e-30
      %v1294 = vrcp.pop %v1292
      %v1295 = vmul.f32 %v1276, %v1294
      %v1296 = vrcp.pop %v1293
      %v1297 = vmul.f32 %v1277, %v1296
      %1300 = vrot.lane.b32.xlu0 %v1295, 116
      %v1301 = vpop.permute.xlu0 %1300
      %1302 = vrot.lane.b32.xlu0 %v1297, 116
      %v1303 = vpop.permute.xlu0 %1302
      %v1304 = vrot.slane %v918, 4
      %v1305 = vrot.slane %v923, 4
      %v1306 = vsel %vm424, %v1304, %v1305
      %1307 = vrot.lane.b32.xlu0 %v1306, 64
      %v1308 = vpop.permute.xlu0 %1307
      %1309 = vrot.lane.b32.xlu0 %v1305, 64
      %v1310 = vpop.permute.xlu0 %1309
      %1312 = vrot.lane.b32.xlu0 %v1019, 64
      %v1313 = vpop.permute.xlu0 %1312
      %v1315 = vsel %vm691, %v1301, 0
      %v1317 = vsel %vm691, %v1303, 0
      %v1319 = vsel %vm726, %v1310, 0
      %1321 = vmatprep.subr.mxu0 0.0
      %1322 = vmatpush1.msra.mxu0 0.0
      %1323 = vmatprep.subr.mxu0 0.0
      %1324 = vmatpush1.msra.mxu0 0.0
      %1325 = vmatprep.subr.mxu0 0.0
      %1326 = vmatpush1.msra.mxu0 0.0
      %1327 = vmatprep.subr.mxu0 0.0
      %1328 = vmatpush1.msra.mxu0 0.0
      %1329 = vmatprep.subr.mxu0 0.0
      %1330 = vmatpush1.msra.mxu0 0.0
      %1331 = vmatprep.subr.mxu0 0.0
      %1332 = vmatpush1.msra.mxu0 0.0
      %1333 = vmatprep.subr.mxu0 0.0
      %1334 = vmatpush1.msra.mxu0 0.0
      %1335 = vmatprep.subr.mxu0 0.0
      %1336 = vmatpush1.msra.mxu0 0.0
      %1337 = vmatprep.subr.mxu0 0.0
      %1338 = vmatpush1.msra.mxu0 0.0
      %1339 = vmatprep.subr.mxu0 0.0
      %1340 = vmatpush1.msra.mxu0 0.0
      %1341 = vmatprep.subr.mxu0 0.0
      %1342 = vmatpush1.msra.mxu0 0.0
      %1343 = vmatprep.subr.mxu0 0.0
      %1344 = vmatpush1.msra.mxu0 0.0
      %1345 = vmatprep.subr.mxu0 0.0
      %1346 = vmatpush1.msra.mxu0 0.0
      %1347 = vmatprep.subr.mxu0 0.0
      %1348 = vmatpush1.msra.mxu0 0.0
      %1349 = vmatprep.subr.mxu0 0.0
      %1350 = vmatpush1.msra.mxu0 %v1319
      %1351 = vmatprep.subr.mxu0 0.0
      %1352 = vmatpush1.msra.mxu0 %v1308
      %1353 = vmatprep.subr.mxu0 0.0
      %1354 = vmatpush2.msra.mxu0 0.0
      %1355 = vmatprep.subr.mxu0 0.0
      %1356 = vmatpush2.msra.mxu0 0.0
      %1357 = vmatprep.subr.mxu0 0.0
      %1358 = vmatpush2.msra.mxu0 0.0
      %1359 = vmatprep.subr.mxu0 0.0
      %1360 = vmatpush2.msra.mxu0 0.0
      %1361 = vmatprep.subr.mxu0 0.0
      %1362 = vmatpush2.msra.mxu0 0.0
      %1363 = vmatprep.subr.mxu0 0.0
      %1364 = vmatpush2.msra.mxu0 0.0
      %1365 = vmatprep.subr.mxu0 0.0
      %1366 = vmatpush2.msra.mxu0 0.0
      %1367 = vmatprep.subr.mxu0 0.0
      %1368 = vmatpush2.msra.mxu0 0.0
      %1369 = vmatprep.subr.mxu0 0.0
      %1370 = vmatpush2.msra.mxu0 0.0
      %1371 = vmatprep.subr.mxu0 0.0
      %1372 = vmatpush2.msra.mxu0 0.0
      %1373 = vmatprep.subr.mxu0 0.0
      %1374 = vmatpush2.msra.mxu0 0.0
      %1375 = vmatprep.subr.mxu0 0.0
      %1376 = vmatpush2.msra.mxu0 0.0
      %1377 = vmatprep.subr.mxu0 0.0
      %1378 = vmatpush2.msra.mxu0 0.0
      %1379 = vmatprep.subr.mxu0 0.0
      %1380 = vmatpush2.msra.mxu0 0.0
      %1381 = vmatprep.subr.mxu0 0.0
      %1382 = vmatpush2.msra.mxu0 0.0
      %1383 = vmatprep.subr.mxu0 0.0
      %1384 = vmatpush2.msra.mxu0 0.0
      %1385 = vmatprep.mubr.f32.mxu0 0.0
      %1386 = vmatmul.mubr.f32.gmra.mxu0 %v1315
      %v1387 = vpop.f32.mrf.mxu0
      %v1388 = vadd.f32 %v1313, %v1387
      %v1389 = vpop.f32.mrf.mxu0
      %1390 = vmatprep.mubr.f32.mxu0 0.0
      %1391 = vmatmul.mubr.f32.gmra.mxu0 %v1317
      %v1392 = vpop.f32.mrf.mxu0
      %v1393 = vadd.f32 %v1313, %v1392
      %v1394 = vpop.f32.mrf.mxu0
      %1395 = vdwg.mxu0
      %v1396 = vadd.f32 %v1095, %v1388
      %v1397 = vadd.f32 %v1100, %v1393
      %v1398 = vsel %vm837, %v1396, 0.0
      %vm1399 = vcmask 257024
      %v1400 = vsel %vm1399, %v1397, 0.0
      %v1401 = vadd.f32 %v1398, %v1400
      %v1402 = vrot.slane %v1401, 4
      %v1403 = vadd.f32 %v1401, %v1402
      %v1404 = vrot.slane %v1403, 2
      %v1405 = vadd.f32 %v1403, %v1404
      %v1406 = vrot.slane %v1405, 1
      %v1407 = vadd.f32 %v1405, %v1406
      %v1408 = vmul.f32 %v1407, 0.083333336
      %v1409 = vsel %vm837, %v1236, 0.0
      %vm1410 = vcmask 254976
      %v1411 = vsel %vm1410, %v1241, 0.0
      %v1412 = vadd.f32 %v1409, %v1411
      %v1413 = vrot.slane %v1412, 4
      %v1414 = vadd.f32 %v1412, %v1413
      %v1415 = vrot.slane %v1414, 2
      %v1416 = vadd.f32 %v1414, %v1415
      %v1417 = vrot.slane %v1416, 1
      %v1418 = vadd.f32 %v1416, %v1417
      %v1419 = vmul.f32 %v1418, 0.1
      %v1420 = vadd.f32 %v1408, %v1419
      %1425 = vrot.lane.b32.xlu0 %v223, 26
      %v1426 = vpop.permute.xlu0 %1425
      %1427 = vrot.lane.b32.xlu0 %v224, 26
      %v1428 = vpop.permute.xlu0 %1427
      %1429 = vrot.lane.b32.xlu0 %v225, 26
      %v1430 = vpop.permute.xlu0 %1429
      %1431 = vrot.lane.b32.xlu0 %v226, 26
      %v1432 = vpop.permute.xlu0 %1431
      %1438 = vrot.lane.b32.xlu0 %v227, 26
      %v1439 = vpop.permute.xlu0 %1438
      %v1442 = vsel %vm837, %v1420, 0
      %1444 = vmatprep.subr.mxu0 0.0
      %1445 = vmatpush1.msra.mxu0 0.0
      %1446 = vmatprep.subr.mxu0 0.0
      %1447 = vmatpush1.msra.mxu0 0.0
      %1448 = vmatprep.subr.mxu0 0.0
      %1449 = vmatpush1.msra.mxu0 0.0
      %1450 = vmatprep.subr.mxu0 0.0
      %1451 = vmatpush1.msra.mxu0 0.0
      %1452 = vmatprep.subr.mxu0 0.0
      %1453 = vmatpush1.msra.mxu0 0.0
      %1454 = vmatprep.subr.mxu0 0.0
      %1455 = vmatpush1.msra.mxu0 0.0
      %1456 = vmatprep.subr.mxu0 0.0
      %1457 = vmatpush1.msra.mxu0 0.0
      %1458 = vmatprep.subr.mxu0 0.0
      %1459 = vmatpush1.msra.mxu0 0.0
      %1460 = vmatprep.subr.mxu0 0.0
      %1461 = vmatpush1.msra.mxu0 0.0
      %1462 = vmatprep.subr.mxu0 0.0
      %1463 = vmatpush1.msra.mxu0 0.0
      %1464 = vmatprep.subr.mxu0 0.0
      %1465 = vmatpush1.msra.mxu0 0.0
      %1466 = vmatprep.subr.mxu0 0.0
      %1467 = vmatpush1.msra.mxu0 0.0
      %1468 = vmatprep.subr.mxu0 0.0
      %1469 = vmatpush1.msra.mxu0 %v1432
      %1470 = vmatprep.subr.mxu0 0.0
      %1471 = vmatpush1.msra.mxu0 %v1430
      %1472 = vmatprep.subr.mxu0 0.0
      %1473 = vmatpush1.msra.mxu0 %v1428
      %1474 = vmatprep.subr.mxu0 0.0
      %1475 = vmatpush1.msra.mxu0 %v1426
      %1476 = vmatprep.subr.mxu0 0.0
      %1477 = vmatpush2.msra.mxu0 0.0
      %1478 = vmatprep.subr.mxu0 0.0
      %1479 = vmatpush2.msra.mxu0 0.0
      %1480 = vmatprep.subr.mxu0 0.0
      %1481 = vmatpush2.msra.mxu0 0.0
      %1482 = vmatprep.subr.mxu0 0.0
      %1483 = vmatpush2.msra.mxu0 0.0
      %1484 = vmatprep.subr.mxu0 0.0
      %1485 = vmatpush2.msra.mxu0 0.0
      %1486 = vmatprep.subr.mxu0 0.0
      %1487 = vmatpush2.msra.mxu0 0.0
      %1488 = vmatprep.subr.mxu0 0.0
      %1489 = vmatpush2.msra.mxu0 0.0
      %1490 = vmatprep.subr.mxu0 0.0
      %1491 = vmatpush2.msra.mxu0 0.0
      %1492 = vmatprep.subr.mxu0 0.0
      %1493 = vmatpush2.msra.mxu0 0.0
      %1494 = vmatprep.subr.mxu0 0.0
      %1495 = vmatpush2.msra.mxu0 0.0
      %1496 = vmatprep.subr.mxu0 0.0
      %1497 = vmatpush2.msra.mxu0 0.0
      %1498 = vmatprep.subr.mxu0 0.0
      %1499 = vmatpush2.msra.mxu0 0.0
      %1500 = vmatprep.subr.mxu0 0.0
      %1501 = vmatpush2.msra.mxu0 0.0
      %1502 = vmatprep.subr.mxu0 0.0
      %1503 = vmatpush2.msra.mxu0 0.0
      %1504 = vmatprep.subr.mxu0 0.0
      %1505 = vmatpush2.msra.mxu0 0.0
      %1506 = vmatprep.subr.mxu0 0.0
      %1507 = vmatpush2.msra.mxu0 0.0
      %1508 = vmatprep.mubr.f32.mxu0 0.0
      %1509 = vmatmul.mubr.f32.gmra.mxu0 %v1442
      %v1510 = vpop.f32.mrf.mxu0
      %v1511 = vadd.f32 %v1439, %v1510
      %v1512 = vpop.f32.mrf.mxu0
      %1513 = vdwg.mxu0
      %v1514 = vxor.u32 %v1511, 2147483648
      %v1515 = vmul.f32 %v1514, 1.442695
      %v1516 = vpow.pop %v1515
      %v1517 = vadd.f32 %v1516, 1.0
      %v1518 = vrcp.pop %v1517
      %v1519 = vmul.f32 1.0, %v1518
      %vm1520 = vcmask 0
      %1521 = vst.msk [vmem:[%s213] sm:$0x1] %vm1520, %v1519
      %p1522 = scmp.lt.s32.totalorder %s15, 7
      %s1523 = scalar_select %p1522, %s15, 7
      %s1524 = scalar_lea.vmem %s4, %s1523
      // Predicated region
      $region37: #{forward.1} parent=35 // pred_check
        %p1525 = pneg %p127
      $region38: #{forward.1} parent=35 // pred_check_branch
        %1527 = sbr.rel (%p1525) target = $region40
      $region39: #{forward.1} parent=35 // pred_region
        _
      $region40: #{forward.1} parent=35 // pred_fallthru
        _
    $region36: #{forward.1} parent=5 // pred_fallthru
      _
    %p1528 = scmp.le.s32.totalorder 2, %s10
    // Predicated region
    $region41: #{forward.1} parent=5 // pred_check
      %p1529 = pneg %p1528
    $region42: #{forward.1} parent=5 // pred_check_branch
      %1531 = sbr.rel (%p1529) target = $region44
    $region43: #{forward.1} parent=5 // pred_region
      %s1532 = ssub.s32 %s10, 2
      // Predicated region
      $region45: #{forward.1} parent=43 // pred_check
        %p1533 = pneg %p133
      $region46: #{forward.1} parent=43 // pred_check_branch
        %1535 = sbr.rel (%p1533) target = $region48
      $region47: #{forward.1} parent=43 // pred_region
        %p1536 = scmp.lt.s32.totalorder %s16, 7
        %s1537 = scalar_select %p1536, %s16, 7
        %s1538 = scalar_lea.vmem %s4, %s1537
      $region48: #{forward.1} parent=43 // pred_fallthru
        _
    $region44: #{forward.1} parent=5 // pred_fallthru
      _
  $region6: #{forward.1} parent=0 // loop_footer
    %s14 = sadd.s32 1, %s10
  $region7: #{forward.1} parent=0 // loop_footer_branch
    %9 = sbr.rel target = $region3
  $region8: #{forward.1} parent=0 // loop_exit
    _

</llo_original>
